<compile_context>
chip_gen: v7x
topology: tpu7x:2x2x1
jax: 0.10.0
libtpu: 0.0.40
codegen_flags: <defaults>
</compile_context>

<pallas_src>
import functools

import jax
import jax.numpy as jnp
from jax import lax
from jax.experimental import pallas as pl
from jax.experimental.pallas import tpu as pltpu


# -----------------------------------------------------------------------------
# Fused multi-layer (wavefront) LSTM + last-step FC + sigmoid kernel.
# -----------------------------------------------------------------------------
def make_fused_kernel(n_layers, H):
    fourH = 4 * H

    def kernel(*refs):
        n_in = 3 + 3 * n_layers
        x_ref = refs[0]                               # (S, Bp, E)   f32
        layer_refs = refs[1:1 + 3 * n_layers]         # per layer: wih, whh, b
        fcw_ref = refs[n_in - 2]                      # (H, Op)      bf16
        fcb_ref = refs[n_in - 1]                      # (1, Op)      f32
        sig_ref = refs[n_in + 0]                      # (Bp, Op)     f32  out
        hn_ref = refs[n_in + 1]                       # (L, Bp, H)   f32  out
        cn_ref = refs[n_in + 2]                       # (L, Bp, H)   f32  out
        xproj_scr = refs[n_in + 3]                    # (S, Bp, 4H)  bf16 scratch

        S, Bp, E = x_ref.shape

        # Hoisted lane masks for the single-tanh gate pass.
        # PyTorch gate order [i, f, g, o]; g lanes [2H, 3H) use tanh(x),
        # the rest use sigmoid(x) = 0.5*tanh(0.5*x) + 0.5.
        lane = lax.broadcasted_iota(jnp.int32, (Bp, fourH), 1)
        is_g = (lane >= 2 * H) & (lane < 3 * H)
        gate_scale = jnp.where(is_g, 1.0, 0.5).astype(jnp.float32)   # pre & post
        gate_bias = jnp.where(is_g, 0.0, 0.5).astype(jnp.float32)    # post only

        # --- Hoisted layer-0 input projection: one big MXU matmul + bias. ----
        wih0_ref = layer_refs[0]                      # (E, 4H)  bf16
        b0_ref = layer_refs[2]                        # (1, 4H)  f32
        x_flat = x_ref[...].reshape(S * Bp, E)
        xproj0 = (jnp.dot(x_flat.astype(wih0_ref.dtype), wih0_ref[...],
                          preferred_element_type=jnp.float32)
                  + b0_ref[...])                      # (S*Bp, 4H) f32
        xproj_scr[...] = xproj0.reshape(S, Bp, fourH).astype(xproj_scr.dtype)

        # Hoist all recurrent-weight loads out of the wavefront loop.
        whhs = [layer_refs[3 * l + 1][...] for l in range(n_layers)]   # (H,4H) bf16
        wihs = [layer_refs[3 * l + 0][...] for l in range(1, n_layers)]  # (H,4H)
        biases = [layer_refs[3 * l + 2][...] for l in range(1, n_layers)]  # (1,4H)

        zeros_h = jnp.zeros((Bp, H), jnp.float32)
        init = (tuple(zeros_h for _ in range(n_layers)),
                tuple(zeros_h for _ in range(n_layers)))

        W = S + n_layers - 1   # number of wavefront steps

        def wave(w, carry):
            hs, cs = carry
            new_hs = list(hs)
            new_cs = list(cs)
            for l in range(n_layers):
                t = w - l
                valid = jnp.logical_and(t >= 0, t < S)
                if l == 0:
                    t_c = jnp.clip(t, 0, S - 1)       # keep loads in-bounds
                    in_gates = xproj_scr[t_c].astype(jnp.float32)
                else:
                    # Layer l >= 1 consumes layer l-1's h from the PREVIOUS
                    # wavefront step (read from the carry -> independent of
                    # this step's layer l-1 update).
                    in_gates = (jnp.dot(hs[l - 1].astype(wihs[l - 1].dtype),
                                        wihs[l - 1],
                                        preferred_element_type=jnp.float32)
                                + biases[l - 1])
                gates = in_gates + jnp.dot(hs[l].astype(whhs[l].dtype), whhs[l],
                                           preferred_element_type=jnp.float32)
                # Single-tanh nonlinearity over the whole (Bp, 4H) tile.
                th = jnp.tanh(gates * gate_scale)
                act = gate_scale * th + gate_bias
                i_g = act[:, 0:H]
                f_g = act[:, H:2 * H]
                g_g = act[:, 2 * H:3 * H]
                o_g = act[:, 3 * H:4 * H]
                c_new = f_g * cs[l] + i_g * g_g
                h_new = o_g * jnp.tanh(c_new)
                new_hs[l] = jnp.where(valid, h_new, hs[l])
                new_cs[l] = jnp.where(valid, c_new, cs[l])
            return (tuple(new_hs), tuple(new_cs))

        unroll = True if W <= 32 else 8
        hs, cs = lax.fori_loop(0, W, wave, init, unroll=unroll)

        # Write final hidden/cell states immediately (frees vregs).
        for l in range(n_layers):
            hn_ref[l] = hs[l]
            cn_ref[l] = cs[l]

        # Final FC + sigmoid on the top layer's last-timestep hidden state
        # (sigmoid_out.view(B,-1)[:, -1] only depends on timestep S-1).
        logits = (jnp.dot(hs[n_layers - 1].astype(fcw_ref.dtype), fcw_ref[...],
                          preferred_element_type=jnp.float32)
                  + fcb_ref[...])                     # (Bp, Op)
        sig_ref[...] = jax.nn.sigmoid(logits)

    return kernel


def _fused_lstm_fc_call(x_p, layer_params, fc_w_t, fc_b, *, n_layers, H, Op):
    """x_p: (S, Bp, E) f32, batch already padded to a multiple of 8."""
    S, Bp, E = x_p.shape

    kernel = make_fused_kernel(n_layers, H)

    in_specs = [pl.BlockSpec((S, Bp, E), lambda i: (0, 0, 0))]
    in_arrays = [x_p]
    for (wih, whh, b) in layer_params:
        in_specs += [
            pl.BlockSpec(wih.shape, lambda i: (0, 0)),
            pl.BlockSpec(whh.shape, lambda i: (0, 0)),
            pl.BlockSpec(b.shape, lambda i: (0, 0)),
        ]
        in_arrays += [wih, whh, b]
    in_specs += [
        pl.BlockSpec(fc_w_t.shape, lambda i: (0, 0)),
        pl.BlockSpec(fc_b.shape, lambda i: (0, 0)),
    ]
    in_arrays += [fc_w_t, fc_b]

    out_shapes = (
        jax.ShapeDtypeStruct((Bp, Op), jnp.float32),
        jax.ShapeDtypeStruct((n_layers, Bp, H), jnp.float32),
        jax.ShapeDtypeStruct((n_layers, Bp, H), jnp.float32),
    )
    out_specs = [
        pl.BlockSpec((Bp, Op), lambda i: (0, 0)),
        pl.BlockSpec((n_layers, Bp, H), lambda i: (0, 0, 0)),
        pl.BlockSpec((n_layers, Bp, H), lambda i: (0, 0, 0)),
    ]

    grid_spec = pltpu.PrefetchScalarGridSpec(
        num_scalar_prefetch=0,
        grid=(1,),
        in_specs=in_specs,
        out_specs=out_specs,
        scratch_shapes=[
            pltpu.VMEM((S, Bp, 4 * H), jnp.bfloat16),   # hoisted layer-0 input proj
        ],
    )
    return pl.pallas_call(
        kernel,
        out_shape=out_shapes,
        grid_spec=grid_spec,
        compiler_params=pltpu.CompilerParams(
            dimension_semantics=("arbitrary",),
            vmem_limit_bytes=32 * 1024 * 1024),
    )(*in_arrays)


# -----------------------------------------------------------------------------
# Parameters (bf16 matmul weights, f32 biases) and full-module forward.
# -----------------------------------------------------------------------------
def init_params(key, n_vocab, n_embed, n_hidden, n_output, n_layers):
    params = {}
    k = key
    k, sub = jax.random.split(k)
    params["embedding"] = jax.random.normal(sub, (n_vocab, n_embed),
                                            dtype=jnp.float32)
    bound = 1.0 / float(n_hidden) ** 0.5
    for layer in range(n_layers):
        in_size = n_embed if layer == 0 else n_hidden
        k, k1, k2, k3, k4 = jax.random.split(k, 5)
        w_ih = jax.random.uniform(k1, (4 * n_hidden, in_size),
                                  minval=-bound, maxval=bound, dtype=jnp.float32)
        w_hh = jax.random.uniform(k2, (4 * n_hidden, n_hidden),
                                  minval=-bound, maxval=bound, dtype=jnp.float32)
        b_ih = jax.random.uniform(k3, (4 * n_hidden,),
                                  minval=-bound, maxval=bound, dtype=jnp.float32)
        b_hh = jax.random.uniform(k4, (4 * n_hidden,),
                                  minval=-bound, maxval=bound, dtype=jnp.float32)
        params[f"w_ih_t_{layer}"] = w_ih.T.astype(jnp.bfloat16)     # (in, 4H)
        params[f"w_hh_t_{layer}"] = w_hh.T.astype(jnp.bfloat16)     # (H, 4H)
        params[f"b_{layer}"] = (b_ih + b_hh).reshape(1, -1)         # (1, 4H) f32
    k, k1, k2 = jax.random.split(k, 3)
    fc_w = jax.random.uniform(k1, (n_output, n_hidden),
                              minval=-bound, maxval=bound, dtype=jnp.float32)
    fc_b = jax.random.uniform(k2, (n_output,),
                              minval=-bound, maxval=bound, dtype=jnp.float32)
    # Pad FC output dim to 128 lanes for a dense output store.
    o_pad = ((n_output + 127) // 128) * 128
    fc_w_t = jnp.zeros((n_hidden, o_pad), jnp.float32).at[:, :n_output].set(fc_w.T)
    fc_b_p = jnp.zeros((1, o_pad), jnp.float32).at[:, :n_output].set(
        fc_b.reshape(1, -1))
    params["fc_w_t"] = fc_w_t.astype(jnp.bfloat16)                  # (H, Op)
    params["fc_b"] = fc_b_p                                         # (1, Op) f32
    return params


@functools.partial(jax.jit,
                   static_argnames=("n_layers", "n_hidden", "n_output",
                                    "batch_size"))
def sentiment_lstm_forward(params, input_words, *, n_layers, n_hidden,
                           n_output, batch_size):
    # Embedding lookup (glue, outside the kernel).
    emb = params["embedding"][input_words]           # (B, S, E)
    x = jnp.transpose(emb, (1, 0, 2))                # (S, B, E)
    S, B, E = x.shape
    Bp = ((batch_size + 7) // 8) * 8                 # sublane-pad batch
    x_p = jnp.pad(x, ((0, 0), (0, Bp - batch_size), (0, 0)))
    Op = params["fc_b"].shape[1]

    layer_params = [(params[f"w_ih_t_{l}"],
                     params[f"w_hh_t_{l}"],
                     params[f"b_{l}"]) for l in range(n_layers)]

    sig_p, hn_p, cn_p = _fused_lstm_fc_call(
        x_p, layer_params, params["fc_w_t"], params["fc_b"],
        n_layers=n_layers, H=n_hidden, Op=Op)

    # sigmoid_out.view(B, -1)[:, -1] == sigmoid(fc(h_last))[:, n_output-1]
    sigmoid_last = sig_p[:batch_size, n_output - 1]
    h_n = hn_p[:, :batch_size, :]                    # (n_layers, B, H)
    c_n = cn_p[:, :batch_size, :]                    # (n_layers, B, H)
    return sigmoid_last, (h_n, c_n)


# -----------------------------------------------------------------------------
# Pure-JAX f32 reference (same bf16 weight values, f32 math) for validation.
# -----------------------------------------------------------------------------
def reference_forward(params, input_words, *, n_layers, n_hidden, n_output):
    emb = params["embedding"][input_words]           # (B, S, E)
    B, S, _ = emb.shape
    layer_in = emb
    h_layers, c_layers = [], []
    for l in range(n_layers):
        wih = params[f"w_ih_t_{l}"].astype(jnp.float32)
        whh = params[f"w_hh_t_{l}"].astype(jnp.float32)
        b = params[f"b_{l}"].astype(jnp.float32)
        h = jnp.zeros((B, n_hidden), jnp.float32)
        c = jnp.zeros((B, n_hidden), jnp.float32)
        outs = []
        for t in range(S):
            gates = layer_in[:, t, :] @ wih + h @ whh + b
            i_g = jax.nn.sigmoid(gates[:, :n_hidden])
            f_g = jax.nn.sigmoid(gates[:, n_hidden:2 * n_hidden])
            g_g = jnp.tanh(gates[:, 2 * n_hidden:3 * n_hidden])
            o_g = jax.nn.sigmoid(gates[:, 3 * n_hidden:])
            c = f_g * c + i_g * g_g
            h = o_g * jnp.tanh(c)
            outs.append(h)
        layer_in = jnp.stack(outs, axis=1)
        h_layers.append(h)
        c_layers.append(c)
    fc_w = params["fc_w_t"].astype(jnp.float32)
    sig = jax.nn.sigmoid(layer_in[:, -1, :] @ fc_w + params["fc_b"])
    return sig[:, n_output - 1], (jnp.stack(h_layers), jnp.stack(c_layers))


if __name__ == "__main__":
    # Small, module-consistent shapes.
    n_vocab, n_embed, n_hidden, n_output, n_layers = 64, 32, 32, 1, 2
    batch_size, seq_len = 2, 8

    key = jax.random.PRNGKey(0)
    k_param, k_ids = jax.random.split(key)
    params = init_params(k_param, n_vocab, n_embed, n_hidden, n_output, n_layers)
    input_words = jax.random.randint(k_ids, (batch_size, seq_len), 0, n_vocab,
                                     dtype=jnp.int32)

    sigmoid_last, (h_n, c_n) = sentiment_lstm_forward(
        params, input_words,
        n_layers=n_layers, n_hidden=n_hidden, n_output=n_output,
        batch_size=batch_size)
    jax.block_until_ready((sigmoid_last, h_n, c_n))

    assert sigmoid_last.shape == (batch_size,)
    assert h_n.shape == (n_layers, batch_size, n_hidden)
    assert c_n.shape == (n_layers, batch_size, n_hidden)
    assert bool(jnp.all(jnp.isfinite(sigmoid_last)))

    # Relaxed-tolerance check vs. f32 reference (bf16 intermediates in-kernel).
    ref_sig, (ref_h, ref_c) = reference_forward(
        params, input_words,
        n_layers=n_layers, n_hidden=n_hidden, n_output=n_output)
    assert bool(jnp.max(jnp.abs(sigmoid_last - ref_sig)) < 5e-2)
    assert bool(jnp.max(jnp.abs(h_n - ref_h)) < 5e-2)
    assert bool(jnp.max(jnp.abs(c_n - ref_c)) < 5e-2)

    print("KERNEL_OK")
</pallas_src>

<mosaic_0001>
module attributes {stable_mosaic.version = 11 : i64} {
  func.func @kernel(%arg0: i32, %arg1: memref<8x8x32xf32, #tpu.memory_space<vmem>>, %arg2: memref<32x128xbf16, #tpu.memory_space<vmem>>, %arg3: memref<32x128xbf16, #tpu.memory_space<vmem>>, %arg4: memref<1x128xf32, #tpu.memory_space<vmem>>, %arg5: memref<32x128xbf16, #tpu.memory_space<vmem>>, %arg6: memref<32x128xbf16, #tpu.memory_space<vmem>>, %arg7: memref<1x128xf32, #tpu.memory_space<vmem>>, %arg8: memref<32x128xbf16, #tpu.memory_space<vmem>>, %arg9: memref<1x128xf32, #tpu.memory_space<vmem>>, %arg10: memref<8x128xf32, #tpu.memory_space<vmem>>, %arg11: memref<2x8x32xf32, #tpu.memory_space<vmem>>, %arg12: memref<2x8x32xf32, #tpu.memory_space<vmem>>, %arg13: memref<8x8x128xbf16, #tpu.memory_space<vmem>>) attributes {dimension_semantics = [#tpu.dimension_semantics<arbitrary>], iteration_bounds = array<i64: 1>, scalar_prefetch = 0 : i64, scratch_operands = 1 : i64, tpu.core_type = #tpu.core_type<tc>, window_params = [{pipeline_mode = #tpu.pipeline_mode<synchronous>, transform_indices = @transform_0, window_bounds = array<i64: 8, 8, 32>}, {pipeline_mode = #tpu.pipeline_mode<synchronous>, transform_indices = @transform_1, window_bounds = array<i64: 32, 128>}, {pipeline_mode = #tpu.pipeline_mode<synchronous>, transform_indices = @transform_2, window_bounds = array<i64: 32, 128>}, {pipeline_mode = #tpu.pipeline_mode<synchronous>, transform_indices = @transform_3, window_bounds = array<i64: 1, 128>}, {pipeline_mode = #tpu.pipeline_mode<synchronous>, transform_indices = @transform_4, window_bounds = array<i64: 32, 128>}, {pipeline_mode = #tpu.pipeline_mode<synchronous>, transform_indices = @transform_5, window_bounds = array<i64: 32, 128>}, {pipeline_mode = #tpu.pipeline_mode<synchronous>, transform_indices = @transform_6, window_bounds = array<i64: 1, 128>}, {pipeline_mode = #tpu.pipeline_mode<synchronous>, transform_indices = @transform_7, window_bounds = array<i64: 32, 128>}, {pipeline_mode = #tpu.pipeline_mode<synchronous>, transform_indices = @transform_8, window_bounds = array<i64: 1, 128>}, {pipeline_mode = #tpu.pipeline_mode<synchronous>, transform_indices = @transform_9, window_bounds = array<i64: 8, 128>}, {pipeline_mode = #tpu.pipeline_mode<synchronous>, transform_indices = @transform_10, window_bounds = array<i64: 2, 8, 32>}, {pipeline_mode = #tpu.pipeline_mode<synchronous>, transform_indices = @transform_11, window_bounds = array<i64: 2, 8, 32>}]} {
    %0 = tpu.iota {dimensions = array<i32: 1>} : vector<8x128xi32>
    %c64_i32 = arith.constant 64 : i32
    %1 = vector.broadcast %c64_i32 : i32 to vector<8x128xi32>
    %2 = arith.cmpi sge, %0, %1 : vector<8x128xi32>
    %c96_i32 = arith.constant 96 : i32
    %3 = vector.broadcast %c96_i32 : i32 to vector<8x128xi32>
    %4 = arith.cmpi slt, %0, %3 : vector<8x128xi32>
    %5 = arith.andi %2, %4 : vector<8x128xi1>
    %cst = arith.constant 1.000000e+00 : f32
    %cst_0 = arith.constant 5.000000e-01 : f32
    %6 = vector.broadcast %cst : f32 to vector<8x128xf32>
    %7 = vector.broadcast %cst_0 : f32 to vector<8x128xf32>
    %8 = arith.select %5, %6, %7 : vector<8x128xi1>, vector<8x128xf32>
    %cst_1 = arith.constant 0.000000e+00 : f32
    %cst_2 = arith.constant 5.000000e-01 : f32
    %9 = vector.broadcast %cst_1 : f32 to vector<8x128xf32>
    %10 = vector.broadcast %cst_2 : f32 to vector<8x128xf32>
    %11 = arith.select %5, %9, %10 : vector<8x128xi1>, vector<8x128xf32>
    %c0 = arith.constant 0 : index
    %c0_3 = arith.constant 0 : index
    %c0_4 = arith.constant 0 : index
    %12 = vector.load %arg1[%c0, %c0_3, %c0_4] : memref<8x8x32xf32, #tpu.memory_space<vmem>>, vector<8x8x32xf32>
    %13 = vector.shape_cast %12 : vector<8x8x32xf32> to vector<64x32xf32>
    %14 = arith.truncf %13 : vector<64x32xf32> to vector<64x32xbf16>
    %c0_5 = arith.constant 0 : index
    %c0_6 = arith.constant 0 : index
    %15 = vector.load %arg2[%c0_5, %c0_6] : memref<32x128xbf16, #tpu.memory_space<vmem>>, vector<32x128xbf16>
    %cst_7 = arith.constant dense<0.000000e+00> : vector<64x128xf32>
    %16 = tpu.matmul %14, %15, %cst_7 {dimension_numbers = #tpu.dot_dimension_numbers<[1], [0], [0], [1], [0, 0, 1, 1], [], []>} : vector<64x32xbf16>, vector<32x128xbf16>, vector<64x128xf32> -> vector<64x128xf32>
    %c0_8 = arith.constant 0 : index
    %c0_9 = arith.constant 0 : index
    %17 = vector.load %arg4[%c0_8, %c0_9] : memref<1x128xf32, #tpu.memory_space<vmem>>, vector<1x128xf32>
    %18 = vector.broadcast %17 : vector<1x128xf32> to vector<64x128xf32>
    %19 = arith.addf %16, %18 : vector<64x128xf32>
    %20 = vector.shape_cast %19 : vector<64x128xf32> to vector<8x8x128xf32>
    %21 = arith.truncf %20 : vector<8x8x128xf32> to vector<8x8x128xbf16>
    %c0_10 = arith.constant 0 : index
    %c0_11 = arith.constant 0 : index
    %c0_12 = arith.constant 0 : index
    %22 = vector.load %arg13[%c0_10, %c0_11, %c0_12] : memref<8x8x128xbf16, #tpu.memory_space<vmem>>, vector<8x8x128xbf16>
    tpu.vector_store %arg13[%c0_10, %c0_11, %c0_12], %21 {strides = array<i32>} : memref<8x8x128xbf16, #tpu.memory_space<vmem>>, vector<8x8x128xbf16>,
    %c0_13 = arith.constant 0 : index
    %c0_14 = arith.constant 0 : index
    %23 = vector.load %arg3[%c0_13, %c0_14] : memref<32x128xbf16, #tpu.memory_space<vmem>>, vector<32x128xbf16>
    %c0_15 = arith.constant 0 : index
    %c0_16 = arith.constant 0 : index
    %24 = vector.load %arg6[%c0_15, %c0_16] : memref<32x128xbf16, #tpu.memory_space<vmem>>, vector<32x128xbf16>
    %c0_17 = arith.constant 0 : index
    %c0_18 = arith.constant 0 : index
    %25 = vector.load %arg5[%c0_17, %c0_18] : memref<32x128xbf16, #tpu.memory_space<vmem>>, vector<32x128xbf16>
    %c0_19 = arith.constant 0 : index
    %c0_20 = arith.constant 0 : index
    %26 = vector.load %arg7[%c0_19, %c0_20] : memref<1x128xf32, #tpu.memory_space<vmem>>, vector<1x128xf32>
    %cst_21 = arith.constant 0.000000e+00 : f32
    %27 = vector.broadcast %cst_21 : f32 to vector<8x32xf32>
    %c0_i32 = arith.constant 0 : i32
    %c0_i32_22 = arith.constant 0 : i32
    %28 = arith.subi %c0_i32, %c0_i32_22 : i32
    %c0_i32_23 = arith.constant 0 : i32
    %29 = arith.cmpi sge, %28, %c0_i32_23 : i32
    %c8_i32 = arith.constant 8 : i32
    %30 = arith.cmpi slt, %28, %c8_i32 : i32
    %31 = arith.andi %29, %30 : i1
    %c0_i32_24 = arith.constant 0 : i32
    %c7_i32 = arith.constant 7 : i32
    %32 = arith.maxsi %c0_i32_24, %28 : i32
    %33 = arith.minsi %c7_i32, %32 : i32
    %34 = arith.index_cast %33 : i32 to index
    %c0_25 = arith.constant 0 : index
    %c0_26 = arith.constant 0 : index
    %35 = vector.load %arg13[%34, %c0_25, %c0_26] : memref<8x8x128xbf16, #tpu.memory_space<vmem>>, vector<1x8x128xbf16>
    %36 = vector.shape_cast %35 : vector<1x8x128xbf16> to vector<8x128xbf16>
    %37 = arith.extf %36 : vector<8x128xbf16> to vector<8x128xf32>
    %38 = arith.truncf %27 : vector<8x32xf32> to vector<8x32xbf16>
    %cst_27 = arith.constant dense<0.000000e+00> : vector<8x128xf32>
    %39 = tpu.matmul %38, %23, %cst_27 {dimension_numbers = #tpu.dot_dimension_numbers<[1], [0], [0], [1], [0, 0, 1, 1], [], []>} : vector<8x32xbf16>, vector<32x128xbf16>, vector<8x128xf32> -> vector<8x128xf32>
    %40 = arith.addf %37, %39 : vector<8x128xf32>
    %41 = arith.mulf %40, %8 : vector<8x128xf32>
    %42 = math.tanh %41 : vector<8x128xf32>
    %43 = arith.mulf %8, %42 : vector<8x128xf32>
    %44 = arith.addf %43, %11 : vector<8x128xf32>
    %45 = vector.extract_strided_slice %44 {offsets = [0, 0], sizes = [8, 32], strides = [1, 1]} : vector<8x128xf32> to vector<8x32xf32>
    %46 = vector.extract_strided_slice %44 {offsets = [0, 32], sizes = [8, 32], strides = [1, 1]} : vector<8x128xf32> to vector<8x32xf32>
    %47 = vector.extract_strided_slice %44 {offsets = [0, 64], sizes = [8, 32], strides = [1, 1]} : vector<8x128xf32> to vector<8x32xf32>
    %48 = vector.extract_strided_slice %44 {offsets = [0, 96], sizes = [8, 32], strides = [1, 1]} : vector<8x128xf32> to vector<8x32xf32>
    %49 = arith.mulf %46, %27 : vector<8x32xf32>
    %50 = arith.mulf %45, %47 : vector<8x32xf32>
    %51 = arith.addf %49, %50 : vector<8x32xf32>
    %52 = math.tanh %51 : vector<8x32xf32>
    %53 = arith.mulf %48, %52 : vector<8x32xf32>
    %54 = arith.select %31, %53, %27 : vector<8x32xf32>
    %55 = arith.select %31, %51, %27 : vector<8x32xf32>
    %c1_i32 = arith.constant 1 : i32
    %56 = arith.subi %c0_i32, %c1_i32 : i32
    %c0_i32_28 = arith.constant 0 : i32
    %57 = arith.cmpi sge, %56, %c0_i32_28 : i32
    %c8_i32_29 = arith.constant 8 : i32
    %58 = arith.cmpi slt, %56, %c8_i32_29 : i32
    %59 = arith.andi %57, %58 : i1
    %60 = arith.truncf %27 : vector<8x32xf32> to vector<8x32xbf16>
    %cst_30 = arith.constant dense<0.000000e+00> : vector<8x128xf32>
    %61 = tpu.matmul %60, %25, %cst_30 {dimension_numbers = #tpu.dot_dimension_numbers<[1], [0], [0], [1], [0, 0, 1, 1], [], []>} : vector<8x32xbf16>, vector<32x128xbf16>, vector<8x128xf32> -> vector<8x128xf32>
    %62 = vector.broadcast %26 : vector<1x128xf32> to vector<8x128xf32>
    %63 = arith.addf %61, %62 : vector<8x128xf32>
    %64 = arith.truncf %27 : vector<8x32xf32> to vector<8x32xbf16>
    %cst_31 = arith.constant dense<0.000000e+00> : vector<8x128xf32>
    %65 = tpu.matmul %64, %24, %cst_31 {dimension_numbers = #tpu.dot_dimension_numbers<[1], [0], [0], [1], [0, 0, 1, 1], [], []>} : vector<8x32xbf16>, vector<32x128xbf16>, vector<8x128xf32> -> vector<8x128xf32>
    %66 = arith.addf %63, %65 : vector<8x128xf32>
    %67 = arith.mulf %66, %8 : vector<8x128xf32>
    %68 = math.tanh %67 : vector<8x128xf32>
    %69 = arith.mulf %8, %68 : vector<8x128xf32>
    %70 = arith.addf %69, %11 : vector<8x128xf32>
    %71 = vector.extract_strided_slice %70 {offsets = [0, 0], sizes = [8, 32], strides = [1, 1]} : vector<8x128xf32> to vector<8x32xf32>
    %72 = vector.extract_strided_slice %70 {offsets = [0, 32], sizes = [8, 32], strides = [1, 1]} : vector<8x128xf32> to vector<8x32xf32>
    %73 = vector.extract_strided_slice %70 {offsets = [0, 64], sizes = [8, 32], strides = [1, 1]} : vector<8x128xf32> to vector<8x32xf32>
    %74 = vector.extract_strided_slice %70 {offsets = [0, 96], sizes = [8, 32], strides = [1, 1]} : vector<8x128xf32> to vector<8x32xf32>
    %75 = arith.mulf %72, %27 : vector<8x32xf32>
    %76 = arith.mulf %71, %73 : vector<8x32xf32>
    %77 = arith.addf %75, %76 : vector<8x32xf32>
    %78 = math.tanh %77 : vector<8x32xf32>
    %79 = arith.mulf %74, %78 : vector<8x32xf32>
    %80 = arith.select %59, %79, %27 : vector<8x32xf32>
    %81 = arith.select %59, %77, %27 : vector<8x32xf32>
    %c1_i32_32 = arith.constant 1 : i32
    %c0_i32_33 = arith.constant 0 : i32
    %82 = arith.subi %c1_i32_32, %c0_i32_33 : i32
    %c0_i32_34 = arith.constant 0 : i32
    %83 = arith.cmpi sge, %82, %c0_i32_34 : i32
    %c8_i32_35 = arith.constant 8 : i32
    %84 = arith.cmpi slt, %82, %c8_i32_35 : i32
    %85 = arith.andi %83, %84 : i1
    %c0_i32_36 = arith.constant 0 : i32
    %c7_i32_37 = arith.constant 7 : i32
    %86 = arith.maxsi %c0_i32_36, %82 : i32
    %87 = arith.minsi %c7_i32_37, %86 : i32
    %88 = arith.index_cast %87 : i32 to index
    %c0_38 = arith.constant 0 : index
    %c0_39 = arith.constant 0 : index
    %89 = vector.load %arg13[%88, %c0_38, %c0_39] : memref<8x8x128xbf16, #tpu.memory_space<vmem>>, vector<1x8x128xbf16>
    %90 = vector.shape_cast %89 : vector<1x8x128xbf16> to vector<8x128xbf16>
    %91 = arith.extf %90 : vector<8x128xbf16> to vector<8x128xf32>
    %92 = arith.truncf %54 : vector<8x32xf32> to vector<8x32xbf16>
    %cst_40 = arith.constant dense<0.000000e+00> : vector<8x128xf32>
    %93 = tpu.matmul %92, %23, %cst_40 {dimension_numbers = #tpu.dot_dimension_numbers<[1], [0], [0], [1], [0, 0, 1, 1], [], []>} : vector<8x32xbf16>, vector<32x128xbf16>, vector<8x128xf32> -> vector<8x128xf32>
    %94 = arith.addf %91, %93 : vector<8x128xf32>
    %95 = arith.mulf %94, %8 : vector<8x128xf32>
    %96 = math.tanh %95 : vector<8x128xf32>
    %97 = arith.mulf %8, %96 : vector<8x128xf32>
    %98 = arith.addf %97, %11 : vector<8x128xf32>
    %99 = vector.extract_strided_slice %98 {offsets = [0, 0], sizes = [8, 32], strides = [1, 1]} : vector<8x128xf32> to vector<8x32xf32>
    %100 = vector.extract_strided_slice %98 {offsets = [0, 32], sizes = [8, 32], strides = [1, 1]} : vector<8x128xf32> to vector<8x32xf32>
    %101 = vector.extract_strided_slice %98 {offsets = [0, 64], sizes = [8, 32], strides = [1, 1]} : vector<8x128xf32> to vector<8x32xf32>
    %102 = vector.extract_strided_slice %98 {offsets = [0, 96], sizes = [8, 32], strides = [1, 1]} : vector<8x128xf32> to vector<8x32xf32>
    %103 = arith.mulf %100, %55 : vector<8x32xf32>
    %104 = arith.mulf %99, %101 : vector<8x32xf32>
    %105 = arith.addf %103, %104 : vector<8x32xf32>
    %106 = math.tanh %105 : vector<8x32xf32>
    %107 = arith.mulf %102, %106 : vector<8x32xf32>
    %108 = arith.select %85, %107, %54 : vector<8x32xf32>
    %109 = arith.select %85, %105, %55 : vector<8x32xf32>
    %c1_i32_41 = arith.constant 1 : i32
    %110 = arith.subi %c1_i32_32, %c1_i32_41 : i32
    %c0_i32_42 = arith.constant 0 : i32
    %111 = arith.cmpi sge, %110, %c0_i32_42 : i32
    %c8_i32_43 = arith.constant 8 : i32
    %112 = arith.cmpi slt, %110, %c8_i32_43 : i32
    %113 = arith.andi %111, %112 : i1
    %114 = arith.truncf %54 : vector<8x32xf32> to vector<8x32xbf16>
    %cst_44 = arith.constant dense<0.000000e+00> : vector<8x128xf32>
    %115 = tpu.matmul %114, %25, %cst_44 {dimension_numbers = #tpu.dot_dimension_numbers<[1], [0], [0], [1], [0, 0, 1, 1], [], []>} : vector<8x32xbf16>, vector<32x128xbf16>, vector<8x128xf32> -> vector<8x128xf32>
    %116 = vector.broadcast %26 : vector<1x128xf32> to vector<8x128xf32>
    %117 = arith.addf %115, %116 : vector<8x128xf32>
    %118 = arith.truncf %80 : vector<8x32xf32> to vector<8x32xbf16>
    %cst_45 = arith.constant dense<0.000000e+00> : vector<8x128xf32>
    %119 = tpu.matmul %118, %24, %cst_45 {dimension_numbers = #tpu.dot_dimension_numbers<[1], [0], [0], [1], [0, 0, 1, 1], [], []>} : vector<8x32xbf16>, vector<32x128xbf16>, vector<8x128xf32> -> vector<8x128xf32>
    %120 = arith.addf %117, %119 : vector<8x128xf32>
    %121 = arith.mulf %120, %8 : vector<8x128xf32>
    %122 = math.tanh %121 : vector<8x128xf32>
    %123 = arith.mulf %8, %122 : vector<8x128xf32>
    %124 = arith.addf %123, %11 : vector<8x128xf32>
    %125 = vector.extract_strided_slice %124 {offsets = [0, 0], sizes = [8, 32], strides = [1, 1]} : vector<8x128xf32> to vector<8x32xf32>
    %126 = vector.extract_strided_slice %124 {offsets = [0, 32], sizes = [8, 32], strides = [1, 1]} : vector<8x128xf32> to vector<8x32xf32>
    %127 = vector.extract_strided_slice %124 {offsets = [0, 64], sizes = [8, 32], strides = [1, 1]} : vector<8x128xf32> to vector<8x32xf32>
    %128 = vector.extract_strided_slice %124 {offsets = [0, 96], sizes = [8, 32], strides = [1, 1]} : vector<8x128xf32> to vector<8x32xf32>
    %129 = arith.mulf %126, %81 : vector<8x32xf32>
    %130 = arith.mulf %125, %127 : vector<8x32xf32>
    %131 = arith.addf %129, %130 : vector<8x32xf32>
    %132 = math.tanh %131 : vector<8x32xf32>
    %133 = arith.mulf %128, %132 : vector<8x32xf32>
    %134 = arith.select %113, %133, %80 : vector<8x32xf32>
    %135 = arith.select %113, %131, %81 : vector<8x32xf32>
    %c2_i32 = arith.constant 2 : i32
    %c0_i32_46 = arith.constant 0 : i32
    %136 = arith.subi %c2_i32, %c0_i32_46 : i32
    %c0_i32_47 = arith.constant 0 : i32
    %137 = arith.cmpi sge, %136, %c0_i32_47 : i32
    %c8_i32_48 = arith.constant 8 : i32
    %138 = arith.cmpi slt, %136, %c8_i32_48 : i32
    %139 = arith.andi %137, %138 : i1
    %c0_i32_49 = arith.constant 0 : i32
    %c7_i32_50 = arith.constant 7 : i32
    %140 = arith.maxsi %c0_i32_49, %136 : i32
    %141 = arith.minsi %c7_i32_50, %140 : i32
    %142 = arith.index_cast %141 : i32 to index
    %c0_51 = arith.constant 0 : index
    %c0_52 = arith.constant 0 : index
    %143 = vector.load %arg13[%142, %c0_51, %c0_52] : memref<8x8x128xbf16, #tpu.memory_space<vmem>>, vector<1x8x128xbf16>
    %144 = vector.shape_cast %143 : vector<1x8x128xbf16> to vector<8x128xbf16>
    %145 = arith.extf %144 : vector<8x128xbf16> to vector<8x128xf32>
    %146 = arith.truncf %108 : vector<8x32xf32> to vector<8x32xbf16>
    %cst_53 = arith.constant dense<0.000000e+00> : vector<8x128xf32>
    %147 = tpu.matmul %146, %23, %cst_53 {dimension_numbers = #tpu.dot_dimension_numbers<[1], [0], [0], [1], [0, 0, 1, 1], [], []>} : vector<8x32xbf16>, vector<32x128xbf16>, vector<8x128xf32> -> vector<8x128xf32>
    %148 = arith.addf %145, %147 : vector<8x128xf32>
    %149 = arith.mulf %148, %8 : vector<8x128xf32>
    %150 = math.tanh %149 : vector<8x128xf32>
    %151 = arith.mulf %8, %150 : vector<8x128xf32>
    %152 = arith.addf %151, %11 : vector<8x128xf32>
    %153 = vector.extract_strided_slice %152 {offsets = [0, 0], sizes = [8, 32], strides = [1, 1]} : vector<8x128xf32> to vector<8x32xf32>
    %154 = vector.extract_strided_slice %152 {offsets = [0, 32], sizes = [8, 32], strides = [1, 1]} : vector<8x128xf32> to vector<8x32xf32>
    %155 = vector.extract_strided_slice %152 {offsets = [0, 64], sizes = [8, 32], strides = [1, 1]} : vector<8x128xf32> to vector<8x32xf32>
    %156 = vector.extract_strided_slice %152 {offsets = [0, 96], sizes = [8, 32], strides = [1, 1]} : vector<8x128xf32> to vector<8x32xf32>
    %157 = arith.mulf %154, %109 : vector<8x32xf32>
    %158 = arith.mulf %153, %155 : vector<8x32xf32>
    %159 = arith.addf %157, %158 : vector<8x32xf32>
    %160 = math.tanh %159 : vector<8x32xf32>
    %161 = arith.mulf %156, %160 : vector<8x32xf32>
    %162 = arith.select %139, %161, %108 : vector<8x32xf32>
    %163 = arith.select %139, %159, %109 : vector<8x32xf32>
    %c1_i32_54 = arith.constant 1 : i32
    %164 = arith.subi %c2_i32, %c1_i32_54 : i32
    %c0_i32_55 = arith.constant 0 : i32
    %165 = arith.cmpi sge, %164, %c0_i32_55 : i32
    %c8_i32_56 = arith.constant 8 : i32
    %166 = arith.cmpi slt, %164, %c8_i32_56 : i32
    %167 = arith.andi %165, %166 : i1
    %168 = arith.truncf %108 : vector<8x32xf32> to vector<8x32xbf16>
    %cst_57 = arith.constant dense<0.000000e+00> : vector<8x128xf32>
    %169 = tpu.matmul %168, %25, %cst_57 {dimension_numbers = #tpu.dot_dimension_numbers<[1], [0], [0], [1], [0, 0, 1, 1], [], []>} : vector<8x32xbf16>, vector<32x128xbf16>, vector<8x128xf32> -> vector<8x128xf32>
    %170 = vector.broadcast %26 : vector<1x128xf32> to vector<8x128xf32>
    %171 = arith.addf %169, %170 : vector<8x128xf32>
    %172 = arith.truncf %134 : vector<8x32xf32> to vector<8x32xbf16>
    %cst_58 = arith.constant dense<0.000000e+00> : vector<8x128xf32>
    %173 = tpu.matmul %172, %24, %cst_58 {dimension_numbers = #tpu.dot_dimension_numbers<[1], [0], [0], [1], [0, 0, 1, 1], [], []>} : vector<8x32xbf16>, vector<32x128xbf16>, vector<8x128xf32> -> vector<8x128xf32>
    %174 = arith.addf %171, %173 : vector<8x128xf32>
    %175 = arith.mulf %174, %8 : vector<8x128xf32>
    %176 = math.tanh %175 : vector<8x128xf32>
    %177 = arith.mulf %8, %176 : vector<8x128xf32>
    %178 = arith.addf %177, %11 : vector<8x128xf32>
    %179 = vector.extract_strided_slice %178 {offsets = [0, 0], sizes = [8, 32], strides = [1, 1]} : vector<8x128xf32> to vector<8x32xf32>
    %180 = vector.extract_strided_slice %178 {offsets = [0, 32], sizes = [8, 32], strides = [1, 1]} : vector<8x128xf32> to vector<8x32xf32>
    %181 = vector.extract_strided_slice %178 {offsets = [0, 64], sizes = [8, 32], strides = [1, 1]} : vector<8x128xf32> to vector<8x32xf32>
    %182 = vector.extract_strided_slice %178 {offsets = [0, 96], sizes = [8, 32], strides = [1, 1]} : vector<8x128xf32> to vector<8x32xf32>
    %183 = arith.mulf %180, %135 : vector<8x32xf32>
    %184 = arith.mulf %179, %181 : vector<8x32xf32>
    %185 = arith.addf %183, %184 : vector<8x32xf32>
    %186 = math.tanh %185 : vector<8x32xf32>
    %187 = arith.mulf %182, %186 : vector<8x32xf32>
    %188 = arith.select %167, %187, %134 : vector<8x32xf32>
    %189 = arith.select %167, %185, %135 : vector<8x32xf32>
    %c3_i32 = arith.constant 3 : i32
    %c0_i32_59 = arith.constant 0 : i32
    %190 = arith.subi %c3_i32, %c0_i32_59 : i32
    %c0_i32_60 = arith.constant 0 : i32
    %191 = arith.cmpi sge, %190, %c0_i32_60 : i32
    %c8_i32_61 = arith.constant 8 : i32
    %192 = arith.cmpi slt, %190, %c8_i32_61 : i32
    %193 = arith.andi %191, %192 : i1
    %c0_i32_62 = arith.constant 0 : i32
    %c7_i32_63 = arith.constant 7 : i32
    %194 = arith.maxsi %c0_i32_62, %190 : i32
    %195 = arith.minsi %c7_i32_63, %194 : i32
    %196 = arith.index_cast %195 : i32 to index
    %c0_64 = arith.constant 0 : index
    %c0_65 = arith.constant 0 : index
    %197 = vector.load %arg13[%196, %c0_64, %c0_65] : memref<8x8x128xbf16, #tpu.memory_space<vmem>>, vector<1x8x128xbf16>
    %198 = vector.shape_cast %197 : vector<1x8x128xbf16> to vector<8x128xbf16>
    %199 = arith.extf %198 : vector<8x128xbf16> to vector<8x128xf32>
    %200 = arith.truncf %162 : vector<8x32xf32> to vector<8x32xbf16>
    %cst_66 = arith.constant dense<0.000000e+00> : vector<8x128xf32>
    %201 = tpu.matmul %200, %23, %cst_66 {dimension_numbers = #tpu.dot_dimension_numbers<[1], [0], [0], [1], [0, 0, 1, 1], [], []>} : vector<8x32xbf16>, vector<32x128xbf16>, vector<8x128xf32> -> vector<8x128xf32>
    %202 = arith.addf %199, %201 : vector<8x128xf32>
    %203 = arith.mulf %202, %8 : vector<8x128xf32>
    %204 = math.tanh %203 : vector<8x128xf32>
    %205 = arith.mulf %8, %204 : vector<8x128xf32>
    %206 = arith.addf %205, %11 : vector<8x128xf32>
    %207 = vector.extract_strided_slice %206 {offsets = [0, 0], sizes = [8, 32], strides = [1, 1]} : vector<8x128xf32> to vector<8x32xf32>
    %208 = vector.extract_strided_slice %206 {offsets = [0, 32], sizes = [8, 32], strides = [1, 1]} : vector<8x128xf32> to vector<8x32xf32>
    %209 = vector.extract_strided_slice %206 {offsets = [0, 64], sizes = [8, 32], strides = [1, 1]} : vector<8x128xf32> to vector<8x32xf32>
    %210 = vector.extract_strided_slice %206 {offsets = [0, 96], sizes = [8, 32], strides = [1, 1]} : vector<8x128xf32> to vector<8x32xf32>
    %211 = arith.mulf %208, %163 : vector<8x32xf32>
    %212 = arith.mulf %207, %209 : vector<8x32xf32>
    %213 = arith.addf %211, %212 : vector<8x32xf32>
    %214 = math.tanh %213 : vector<8x32xf32>
    %215 = arith.mulf %210, %214 : vector<8x32xf32>
    %216 = arith.select %193, %215, %162 : vector<8x32xf32>
    %217 = arith.select %193, %213, %163 : vector<8x32xf32>
    %c1_i32_67 = arith.constant 1 : i32
    %218 = arith.subi %c3_i32, %c1_i32_67 : i32
    %c0_i32_68 = arith.constant 0 : i32
    %219 = arith.cmpi sge, %218, %c0_i32_68 : i32
    %c8_i32_69 = arith.constant 8 : i32
    %220 = arith.cmpi slt, %218, %c8_i32_69 : i32
    %221 = arith.andi %219, %220 : i1
    %222 = arith.truncf %162 : vector<8x32xf32> to vector<8x32xbf16>
    %cst_70 = arith.constant dense<0.000000e+00> : vector<8x128xf32>
    %223 = tpu.matmul %222, %25, %cst_70 {dimension_numbers = #tpu.dot_dimension_numbers<[1], [0], [0], [1], [0, 0, 1, 1], [], []>} : vector<8x32xbf16>, vector<32x128xbf16>, vector<8x128xf32> -> vector<8x128xf32>
    %224 = vector.broadcast %26 : vector<1x128xf32> to vector<8x128xf32>
    %225 = arith.addf %223, %224 : vector<8x128xf32>
    %226 = arith.truncf %188 : vector<8x32xf32> to vector<8x32xbf16>
    %cst_71 = arith.constant dense<0.000000e+00> : vector<8x128xf32>
    %227 = tpu.matmul %226, %24, %cst_71 {dimension_numbers = #tpu.dot_dimension_numbers<[1], [0], [0], [1], [0, 0, 1, 1], [], []>} : vector<8x32xbf16>, vector<32x128xbf16>, vector<8x128xf32> -> vector<8x128xf32>
    %228 = arith.addf %225, %227 : vector<8x128xf32>
    %229 = arith.mulf %228, %8 : vector<8x128xf32>
    %230 = math.tanh %229 : vector<8x128xf32>
    %231 = arith.mulf %8, %230 : vector<8x128xf32>
    %232 = arith.addf %231, %11 : vector<8x128xf32>
    %233 = vector.extract_strided_slice %232 {offsets = [0, 0], sizes = [8, 32], strides = [1, 1]} : vector<8x128xf32> to vector<8x32xf32>
    %234 = vector.extract_strided_slice %232 {offsets = [0, 32], sizes = [8, 32], strides = [1, 1]} : vector<8x128xf32> to vector<8x32xf32>
    %235 = vector.extract_strided_slice %232 {offsets = [0, 64], sizes = [8, 32], strides = [1, 1]} : vector<8x128xf32> to vector<8x32xf32>
    %236 = vector.extract_strided_slice %232 {offsets = [0, 96], sizes = [8, 32], strides = [1, 1]} : vector<8x128xf32> to vector<8x32xf32>
    %237 = arith.mulf %234, %189 : vector<8x32xf32>
    %238 = arith.mulf %233, %235 : vector<8x32xf32>
    %239 = arith.addf %237, %238 : vector<8x32xf32>
    %240 = math.tanh %239 : vector<8x32xf32>
    %241 = arith.mulf %236, %240 : vector<8x32xf32>
    %242 = arith.select %221, %241, %188 : vector<8x32xf32>
    %243 = arith.select %221, %239, %189 : vector<8x32xf32>
    %c4_i32 = arith.constant 4 : i32
    %c0_i32_72 = arith.constant 0 : i32
    %244 = arith.subi %c4_i32, %c0_i32_72 : i32
    %c0_i32_73 = arith.constant 0 : i32
    %245 = arith.cmpi sge, %244, %c0_i32_73 : i32
    %c8_i32_74 = arith.constant 8 : i32
    %246 = arith.cmpi slt, %244, %c8_i32_74 : i32
    %247 = arith.andi %245, %246 : i1
    %c0_i32_75 = arith.constant 0 : i32
    %c7_i32_76 = arith.constant 7 : i32
    %248 = arith.maxsi %c0_i32_75, %244 : i32
    %249 = arith.minsi %c7_i32_76, %248 : i32
    %250 = arith.index_cast %249 : i32 to index
    %c0_77 = arith.constant 0 : index
    %c0_78 = arith.constant 0 : index
    %251 = vector.load %arg13[%250, %c0_77, %c0_78] : memref<8x8x128xbf16, #tpu.memory_space<vmem>>, vector<1x8x128xbf16>
    %252 = vector.shape_cast %251 : vector<1x8x128xbf16> to vector<8x128xbf16>
    %253 = arith.extf %252 : vector<8x128xbf16> to vector<8x128xf32>
    %254 = arith.truncf %216 : vector<8x32xf32> to vector<8x32xbf16>
    %cst_79 = arith.constant dense<0.000000e+00> : vector<8x128xf32>
    %255 = tpu.matmul %254, %23, %cst_79 {dimension_numbers = #tpu.dot_dimension_numbers<[1], [0], [0], [1], [0, 0, 1, 1], [], []>} : vector<8x32xbf16>, vector<32x128xbf16>, vector<8x128xf32> -> vector<8x128xf32>
    %256 = arith.addf %253, %255 : vector<8x128xf32>
    %257 = arith.mulf %256, %8 : vector<8x128xf32>
    %258 = math.tanh %257 : vector<8x128xf32>
    %259 = arith.mulf %8, %258 : vector<8x128xf32>
    %260 = arith.addf %259, %11 : vector<8x128xf32>
    %261 = vector.extract_strided_slice %260 {offsets = [0, 0], sizes = [8, 32], strides = [1, 1]} : vector<8x128xf32> to vector<8x32xf32>
    %262 = vector.extract_strided_slice %260 {offsets = [0, 32], sizes = [8, 32], strides = [1, 1]} : vector<8x128xf32> to vector<8x32xf32>
    %263 = vector.extract_strided_slice %260 {offsets = [0, 64], sizes = [8, 32], strides = [1, 1]} : vector<8x128xf32> to vector<8x32xf32>
    %264 = vector.extract_strided_slice %260 {offsets = [0, 96], sizes = [8, 32], strides = [1, 1]} : vector<8x128xf32> to vector<8x32xf32>
    %265 = arith.mulf %262, %217 : vector<8x32xf32>
    %266 = arith.mulf %261, %263 : vector<8x32xf32>
    %267 = arith.addf %265, %266 : vector<8x32xf32>
    %268 = math.tanh %267 : vector<8x32xf32>
    %269 = arith.mulf %264, %268 : vector<8x32xf32>
    %270 = arith.select %247, %269, %216 : vector<8x32xf32>
    %271 = arith.select %247, %267, %217 : vector<8x32xf32>
    %c1_i32_80 = arith.constant 1 : i32
    %272 = arith.subi %c4_i32, %c1_i32_80 : i32
    %c0_i32_81 = arith.constant 0 : i32
    %273 = arith.cmpi sge, %272, %c0_i32_81 : i32
    %c8_i32_82 = arith.constant 8 : i32
    %274 = arith.cmpi slt, %272, %c8_i32_82 : i32
    %275 = arith.andi %273, %274 : i1
    %276 = arith.truncf %216 : vector<8x32xf32> to vector<8x32xbf16>
    %cst_83 = arith.constant dense<0.000000e+00> : vector<8x128xf32>
    %277 = tpu.matmul %276, %25, %cst_83 {dimension_numbers = #tpu.dot_dimension_numbers<[1], [0], [0], [1], [0, 0, 1, 1], [], []>} : vector<8x32xbf16>, vector<32x128xbf16>, vector<8x128xf32> -> vector<8x128xf32>
    %278 = vector.broadcast %26 : vector<1x128xf32> to vector<8x128xf32>
    %279 = arith.addf %277, %278 : vector<8x128xf32>
    %280 = arith.truncf %242 : vector<8x32xf32> to vector<8x32xbf16>
    %cst_84 = arith.constant dense<0.000000e+00> : vector<8x128xf32>
    %281 = tpu.matmul %280, %24, %cst_84 {dimension_numbers = #tpu.dot_dimension_numbers<[1], [0], [0], [1], [0, 0, 1, 1], [], []>} : vector<8x32xbf16>, vector<32x128xbf16>, vector<8x128xf32> -> vector<8x128xf32>
    %282 = arith.addf %279, %281 : vector<8x128xf32>
    %283 = arith.mulf %282, %8 : vector<8x128xf32>
    %284 = math.tanh %283 : vector<8x128xf32>
    %285 = arith.mulf %8, %284 : vector<8x128xf32>
    %286 = arith.addf %285, %11 : vector<8x128xf32>
    %287 = vector.extract_strided_slice %286 {offsets = [0, 0], sizes = [8, 32], strides = [1, 1]} : vector<8x128xf32> to vector<8x32xf32>
    %288 = vector.extract_strided_slice %286 {offsets = [0, 32], sizes = [8, 32], strides = [1, 1]} : vector<8x128xf32> to vector<8x32xf32>
    %289 = vector.extract_strided_slice %286 {offsets = [0, 64], sizes = [8, 32], strides = [1, 1]} : vector<8x128xf32> to vector<8x32xf32>
    %290 = vector.extract_strided_slice %286 {offsets = [0, 96], sizes = [8, 32], strides = [1, 1]} : vector<8x128xf32> to vector<8x32xf32>
    %291 = arith.mulf %288, %243 : vector<8x32xf32>
    %292 = arith.mulf %287, %289 : vector<8x32xf32>
    %293 = arith.addf %291, %292 : vector<8x32xf32>
    %294 = math.tanh %293 : vector<8x32xf32>
    %295 = arith.mulf %290, %294 : vector<8x32xf32>
    %296 = arith.select %275, %295, %242 : vector<8x32xf32>
    %297 = arith.select %275, %293, %243 : vector<8x32xf32>
    %c5_i32 = arith.constant 5 : i32
    %c0_i32_85 = arith.constant 0 : i32
    %298 = arith.subi %c5_i32, %c0_i32_85 : i32
    %c0_i32_86 = arith.constant 0 : i32
    %299 = arith.cmpi sge, %298, %c0_i32_86 : i32
    %c8_i32_87 = arith.constant 8 : i32
    %300 = arith.cmpi slt, %298, %c8_i32_87 : i32
    %301 = arith.andi %299, %300 : i1
    %c0_i32_88 = arith.constant 0 : i32
    %c7_i32_89 = arith.constant 7 : i32
    %302 = arith.maxsi %c0_i32_88, %298 : i32
    %303 = arith.minsi %c7_i32_89, %302 : i32
    %304 = arith.index_cast %303 : i32 to index
    %c0_90 = arith.constant 0 : index
    %c0_91 = arith.constant 0 : index
    %305 = vector.load %arg13[%304, %c0_90, %c0_91] : memref<8x8x128xbf16, #tpu.memory_space<vmem>>, vector<1x8x128xbf16>
    %306 = vector.shape_cast %305 : vector<1x8x128xbf16> to vector<8x128xbf16>
    %307 = arith.extf %306 : vector<8x128xbf16> to vector<8x128xf32>
    %308 = arith.truncf %270 : vector<8x32xf32> to vector<8x32xbf16>
    %cst_92 = arith.constant dense<0.000000e+00> : vector<8x128xf32>
    %309 = tpu.matmul %308, %23, %cst_92 {dimension_numbers = #tpu.dot_dimension_numbers<[1], [0], [0], [1], [0, 0, 1, 1], [], []>} : vector<8x32xbf16>, vector<32x128xbf16>, vector<8x128xf32> -> vector<8x128xf32>
    %310 = arith.addf %307, %309 : vector<8x128xf32>
    %311 = arith.mulf %310, %8 : vector<8x128xf32>
    %312 = math.tanh %311 : vector<8x128xf32>
    %313 = arith.mulf %8, %312 : vector<8x128xf32>
    %314 = arith.addf %313, %11 : vector<8x128xf32>
    %315 = vector.extract_strided_slice %314 {offsets = [0, 0], sizes = [8, 32], strides = [1, 1]} : vector<8x128xf32> to vector<8x32xf32>
    %316 = vector.extract_strided_slice %314 {offsets = [0, 32], sizes = [8, 32], strides = [1, 1]} : vector<8x128xf32> to vector<8x32xf32>
    %317 = vector.extract_strided_slice %314 {offsets = [0, 64], sizes = [8, 32], strides = [1, 1]} : vector<8x128xf32> to vector<8x32xf32>
    %318 = vector.extract_strided_slice %314 {offsets = [0, 96], sizes = [8, 32], strides = [1, 1]} : vector<8x128xf32> to vector<8x32xf32>
    %319 = arith.mulf %316, %271 : vector<8x32xf32>
    %320 = arith.mulf %315, %317 : vector<8x32xf32>
    %321 = arith.addf %319, %320 : vector<8x32xf32>
    %322 = math.tanh %321 : vector<8x32xf32>
    %323 = arith.mulf %318, %322 : vector<8x32xf32>
    %324 = arith.select %301, %323, %270 : vector<8x32xf32>
    %325 = arith.select %301, %321, %271 : vector<8x32xf32>
    %c1_i32_93 = arith.constant 1 : i32
    %326 = arith.subi %c5_i32, %c1_i32_93 : i32
    %c0_i32_94 = arith.constant 0 : i32
    %327 = arith.cmpi sge, %326, %c0_i32_94 : i32
    %c8_i32_95 = arith.constant 8 : i32
    %328 = arith.cmpi slt, %326, %c8_i32_95 : i32
    %329 = arith.andi %327, %328 : i1
    %330 = arith.truncf %270 : vector<8x32xf32> to vector<8x32xbf16>
    %cst_96 = arith.constant dense<0.000000e+00> : vector<8x128xf32>
    %331 = tpu.matmul %330, %25, %cst_96 {dimension_numbers = #tpu.dot_dimension_numbers<[1], [0], [0], [1], [0, 0, 1, 1], [], []>} : vector<8x32xbf16>, vector<32x128xbf16>, vector<8x128xf32> -> vector<8x128xf32>
    %332 = vector.broadcast %26 : vector<1x128xf32> to vector<8x128xf32>
    %333 = arith.addf %331, %332 : vector<8x128xf32>
    %334 = arith.truncf %296 : vector<8x32xf32> to vector<8x32xbf16>
    %cst_97 = arith.constant dense<0.000000e+00> : vector<8x128xf32>
    %335 = tpu.matmul %334, %24, %cst_97 {dimension_numbers = #tpu.dot_dimension_numbers<[1], [0], [0], [1], [0, 0, 1, 1], [], []>} : vector<8x32xbf16>, vector<32x128xbf16>, vector<8x128xf32> -> vector<8x128xf32>
    %336 = arith.addf %333, %335 : vector<8x128xf32>
    %337 = arith.mulf %336, %8 : vector<8x128xf32>
    %338 = math.tanh %337 : vector<8x128xf32>
    %339 = arith.mulf %8, %338 : vector<8x128xf32>
    %340 = arith.addf %339, %11 : vector<8x128xf32>
    %341 = vector.extract_strided_slice %340 {offsets = [0, 0], sizes = [8, 32], strides = [1, 1]} : vector<8x128xf32> to vector<8x32xf32>
    %342 = vector.extract_strided_slice %340 {offsets = [0, 32], sizes = [8, 32], strides = [1, 1]} : vector<8x128xf32> to vector<8x32xf32>
    %343 = vector.extract_strided_slice %340 {offsets = [0, 64], sizes = [8, 32], strides = [1, 1]} : vector<8x128xf32> to vector<8x32xf32>
    %344 = vector.extract_strided_slice %340 {offsets = [0, 96], sizes = [8, 32], strides = [1, 1]} : vector<8x128xf32> to vector<8x32xf32>
    %345 = arith.mulf %342, %297 : vector<8x32xf32>
    %346 = arith.mulf %341, %343 : vector<8x32xf32>
    %347 = arith.addf %345, %346 : vector<8x32xf32>
    %348 = math.tanh %347 : vector<8x32xf32>
    %349 = arith.mulf %344, %348 : vector<8x32xf32>
    %350 = arith.select %329, %349, %296 : vector<8x32xf32>
    %351 = arith.select %329, %347, %297 : vector<8x32xf32>
    %c6_i32 = arith.constant 6 : i32
    %c0_i32_98 = arith.constant 0 : i32
    %352 = arith.subi %c6_i32, %c0_i32_98 : i32
    %c0_i32_99 = arith.constant 0 : i32
    %353 = arith.cmpi sge, %352, %c0_i32_99 : i32
    %c8_i32_100 = arith.constant 8 : i32
    %354 = arith.cmpi slt, %352, %c8_i32_100 : i32
    %355 = arith.andi %353, %354 : i1
    %c0_i32_101 = arith.constant 0 : i32
    %c7_i32_102 = arith.constant 7 : i32
    %356 = arith.maxsi %c0_i32_101, %352 : i32
    %357 = arith.minsi %c7_i32_102, %356 : i32
    %358 = arith.index_cast %357 : i32 to index
    %c0_103 = arith.constant 0 : index
    %c0_104 = arith.constant 0 : index
    %359 = vector.load %arg13[%358, %c0_103, %c0_104] : memref<8x8x128xbf16, #tpu.memory_space<vmem>>, vector<1x8x128xbf16>
    %360 = vector.shape_cast %359 : vector<1x8x128xbf16> to vector<8x128xbf16>
    %361 = arith.extf %360 : vector<8x128xbf16> to vector<8x128xf32>
    %362 = arith.truncf %324 : vector<8x32xf32> to vector<8x32xbf16>
    %cst_105 = arith.constant dense<0.000000e+00> : vector<8x128xf32>
    %363 = tpu.matmul %362, %23, %cst_105 {dimension_numbers = #tpu.dot_dimension_numbers<[1], [0], [0], [1], [0, 0, 1, 1], [], []>} : vector<8x32xbf16>, vector<32x128xbf16>, vector<8x128xf32> -> vector<8x128xf32>
    %364 = arith.addf %361, %363 : vector<8x128xf32>
    %365 = arith.mulf %364, %8 : vector<8x128xf32>
    %366 = math.tanh %365 : vector<8x128xf32>
    %367 = arith.mulf %8, %366 : vector<8x128xf32>
    %368 = arith.addf %367, %11 : vector<8x128xf32>
    %369 = vector.extract_strided_slice %368 {offsets = [0, 0], sizes = [8, 32], strides = [1, 1]} : vector<8x128xf32> to vector<8x32xf32>
    %370 = vector.extract_strided_slice %368 {offsets = [0, 32], sizes = [8, 32], strides = [1, 1]} : vector<8x128xf32> to vector<8x32xf32>
    %371 = vector.extract_strided_slice %368 {offsets = [0, 64], sizes = [8, 32], strides = [1, 1]} : vector<8x128xf32> to vector<8x32xf32>
    %372 = vector.extract_strided_slice %368 {offsets = [0, 96], sizes = [8, 32], strides = [1, 1]} : vector<8x128xf32> to vector<8x32xf32>
    %373 = arith.mulf %370, %325 : vector<8x32xf32>
    %374 = arith.mulf %369, %371 : vector<8x32xf32>
    %375 = arith.addf %373, %374 : vector<8x32xf32>
    %376 = math.tanh %375 : vector<8x32xf32>
    %377 = arith.mulf %372, %376 : vector<8x32xf32>
    %378 = arith.select %355, %377, %324 : vector<8x32xf32>
    %379 = arith.select %355, %375, %325 : vector<8x32xf32>
    %c1_i32_106 = arith.constant 1 : i32
    %380 = arith.subi %c6_i32, %c1_i32_106 : i32
    %c0_i32_107 = arith.constant 0 : i32
    %381 = arith.cmpi sge, %380, %c0_i32_107 : i32
    %c8_i32_108 = arith.constant 8 : i32
    %382 = arith.cmpi slt, %380, %c8_i32_108 : i32
    %383 = arith.andi %381, %382 : i1
    %384 = arith.truncf %324 : vector<8x32xf32> to vector<8x32xbf16>
    %cst_109 = arith.constant dense<0.000000e+00> : vector<8x128xf32>
    %385 = tpu.matmul %384, %25, %cst_109 {dimension_numbers = #tpu.dot_dimension_numbers<[1], [0], [0], [1], [0, 0, 1, 1], [], []>} : vector<8x32xbf16>, vector<32x128xbf16>, vector<8x128xf32> -> vector<8x128xf32>
    %386 = vector.broadcast %26 : vector<1x128xf32> to vector<8x128xf32>
    %387 = arith.addf %385, %386 : vector<8x128xf32>
    %388 = arith.truncf %350 : vector<8x32xf32> to vector<8x32xbf16>
    %cst_110 = arith.constant dense<0.000000e+00> : vector<8x128xf32>
    %389 = tpu.matmul %388, %24, %cst_110 {dimension_numbers = #tpu.dot_dimension_numbers<[1], [0], [0], [1], [0, 0, 1, 1], [], []>} : vector<8x32xbf16>, vector<32x128xbf16>, vector<8x128xf32> -> vector<8x128xf32>
    %390 = arith.addf %387, %389 : vector<8x128xf32>
    %391 = arith.mulf %390, %8 : vector<8x128xf32>
    %392 = math.tanh %391 : vector<8x128xf32>
    %393 = arith.mulf %8, %392 : vector<8x128xf32>
    %394 = arith.addf %393, %11 : vector<8x128xf32>
    %395 = vector.extract_strided_slice %394 {offsets = [0, 0], sizes = [8, 32], strides = [1, 1]} : vector<8x128xf32> to vector<8x32xf32>
    %396 = vector.extract_strided_slice %394 {offsets = [0, 32], sizes = [8, 32], strides = [1, 1]} : vector<8x128xf32> to vector<8x32xf32>
    %397 = vector.extract_strided_slice %394 {offsets = [0, 64], sizes = [8, 32], strides = [1, 1]} : vector<8x128xf32> to vector<8x32xf32>
    %398 = vector.extract_strided_slice %394 {offsets = [0, 96], sizes = [8, 32], strides = [1, 1]} : vector<8x128xf32> to vector<8x32xf32>
    %399 = arith.mulf %396, %351 : vector<8x32xf32>
    %400 = arith.mulf %395, %397 : vector<8x32xf32>
    %401 = arith.addf %399, %400 : vector<8x32xf32>
    %402 = math.tanh %401 : vector<8x32xf32>
    %403 = arith.mulf %398, %402 : vector<8x32xf32>
    %404 = arith.select %383, %403, %350 : vector<8x32xf32>
    %405 = arith.select %383, %401, %351 : vector<8x32xf32>
    %c7_i32_111 = arith.constant 7 : i32
    %c0_i32_112 = arith.constant 0 : i32
    %406 = arith.subi %c7_i32_111, %c0_i32_112 : i32
    %c0_i32_113 = arith.constant 0 : i32
    %407 = arith.cmpi sge, %406, %c0_i32_113 : i32
    %c8_i32_114 = arith.constant 8 : i32
    %408 = arith.cmpi slt, %406, %c8_i32_114 : i32
    %409 = arith.andi %407, %408 : i1
    %c0_i32_115 = arith.constant 0 : i32
    %c7_i32_116 = arith.constant 7 : i32
    %410 = arith.maxsi %c0_i32_115, %406 : i32
    %411 = arith.minsi %c7_i32_116, %410 : i32
    %412 = arith.index_cast %411 : i32 to index
    %c0_117 = arith.constant 0 : index
    %c0_118 = arith.constant 0 : index
    %413 = vector.load %arg13[%412, %c0_117, %c0_118] : memref<8x8x128xbf16, #tpu.memory_space<vmem>>, vector<1x8x128xbf16>
    %414 = vector.shape_cast %413 : vector<1x8x128xbf16> to vector<8x128xbf16>
    %415 = arith.extf %414 : vector<8x128xbf16> to vector<8x128xf32>
    %416 = arith.truncf %378 : vector<8x32xf32> to vector<8x32xbf16>
    %cst_119 = arith.constant dense<0.000000e+00> : vector<8x128xf32>
    %417 = tpu.matmul %416, %23, %cst_119 {dimension_numbers = #tpu.dot_dimension_numbers<[1], [0], [0], [1], [0, 0, 1, 1], [], []>} : vector<8x32xbf16>, vector<32x128xbf16>, vector<8x128xf32> -> vector<8x128xf32>
    %418 = arith.addf %415, %417 : vector<8x128xf32>
    %419 = arith.mulf %418, %8 : vector<8x128xf32>
    %420 = math.tanh %419 : vector<8x128xf32>
    %421 = arith.mulf %8, %420 : vector<8x128xf32>
    %422 = arith.addf %421, %11 : vector<8x128xf32>
    %423 = vector.extract_strided_slice %422 {offsets = [0, 0], sizes = [8, 32], strides = [1, 1]} : vector<8x128xf32> to vector<8x32xf32>
    %424 = vector.extract_strided_slice %422 {offsets = [0, 32], sizes = [8, 32], strides = [1, 1]} : vector<8x128xf32> to vector<8x32xf32>
    %425 = vector.extract_strided_slice %422 {offsets = [0, 64], sizes = [8, 32], strides = [1, 1]} : vector<8x128xf32> to vector<8x32xf32>
    %426 = vector.extract_strided_slice %422 {offsets = [0, 96], sizes = [8, 32], strides = [1, 1]} : vector<8x128xf32> to vector<8x32xf32>
    %427 = arith.mulf %424, %379 : vector<8x32xf32>
    %428 = arith.mulf %423, %425 : vector<8x32xf32>
    %429 = arith.addf %427, %428 : vector<8x32xf32>
    %430 = math.tanh %429 : vector<8x32xf32>
    %431 = arith.mulf %426, %430 : vector<8x32xf32>
    %432 = arith.select %409, %431, %378 : vector<8x32xf32>
    %433 = arith.select %409, %429, %379 : vector<8x32xf32>
    %c1_i32_120 = arith.constant 1 : i32
    %434 = arith.subi %c7_i32_111, %c1_i32_120 : i32
    %c0_i32_121 = arith.constant 0 : i32
    %435 = arith.cmpi sge, %434, %c0_i32_121 : i32
    %c8_i32_122 = arith.constant 8 : i32
    %436 = arith.cmpi slt, %434, %c8_i32_122 : i32
    %437 = arith.andi %435, %436 : i1
    %438 = arith.truncf %378 : vector<8x32xf32> to vector<8x32xbf16>
    %cst_123 = arith.constant dense<0.000000e+00> : vector<8x128xf32>
    %439 = tpu.matmul %438, %25, %cst_123 {dimension_numbers = #tpu.dot_dimension_numbers<[1], [0], [0], [1], [0, 0, 1, 1], [], []>} : vector<8x32xbf16>, vector<32x128xbf16>, vector<8x128xf32> -> vector<8x128xf32>
    %440 = vector.broadcast %26 : vector<1x128xf32> to vector<8x128xf32>
    %441 = arith.addf %439, %440 : vector<8x128xf32>
    %442 = arith.truncf %404 : vector<8x32xf32> to vector<8x32xbf16>
    %cst_124 = arith.constant dense<0.000000e+00> : vector<8x128xf32>
    %443 = tpu.matmul %442, %24, %cst_124 {dimension_numbers = #tpu.dot_dimension_numbers<[1], [0], [0], [1], [0, 0, 1, 1], [], []>} : vector<8x32xbf16>, vector<32x128xbf16>, vector<8x128xf32> -> vector<8x128xf32>
    %444 = arith.addf %441, %443 : vector<8x128xf32>
    %445 = arith.mulf %444, %8 : vector<8x128xf32>
    %446 = math.tanh %445 : vector<8x128xf32>
    %447 = arith.mulf %8, %446 : vector<8x128xf32>
    %448 = arith.addf %447, %11 : vector<8x128xf32>
    %449 = vector.extract_strided_slice %448 {offsets = [0, 0], sizes = [8, 32], strides = [1, 1]} : vector<8x128xf32> to vector<8x32xf32>
    %450 = vector.extract_strided_slice %448 {offsets = [0, 32], sizes = [8, 32], strides = [1, 1]} : vector<8x128xf32> to vector<8x32xf32>
    %451 = vector.extract_strided_slice %448 {offsets = [0, 64], sizes = [8, 32], strides = [1, 1]} : vector<8x128xf32> to vector<8x32xf32>
    %452 = vector.extract_strided_slice %448 {offsets = [0, 96], sizes = [8, 32], strides = [1, 1]} : vector<8x128xf32> to vector<8x32xf32>
    %453 = arith.mulf %450, %405 : vector<8x32xf32>
    %454 = arith.mulf %449, %451 : vector<8x32xf32>
    %455 = arith.addf %453, %454 : vector<8x32xf32>
    %456 = math.tanh %455 : vector<8x32xf32>
    %457 = arith.mulf %452, %456 : vector<8x32xf32>
    %458 = arith.select %437, %457, %404 : vector<8x32xf32>
    %459 = arith.select %437, %455, %405 : vector<8x32xf32>
    %c8_i32_125 = arith.constant 8 : i32
    %c0_i32_126 = arith.constant 0 : i32
    %460 = arith.subi %c8_i32_125, %c0_i32_126 : i32
    %c0_i32_127 = arith.constant 0 : i32
    %461 = arith.cmpi sge, %460, %c0_i32_127 : i32
    %c8_i32_128 = arith.constant 8 : i32
    %462 = arith.cmpi slt, %460, %c8_i32_128 : i32
    %463 = arith.andi %461, %462 : i1
    %c0_i32_129 = arith.constant 0 : i32
    %c7_i32_130 = arith.constant 7 : i32
    %464 = arith.maxsi %c0_i32_129, %460 : i32
    %465 = arith.minsi %c7_i32_130, %464 : i32
    %466 = arith.index_cast %465 : i32 to index
    %c0_131 = arith.constant 0 : index
    %c0_132 = arith.constant 0 : index
    %467 = vector.load %arg13[%466, %c0_131, %c0_132] : memref<8x8x128xbf16, #tpu.memory_space<vmem>>, vector<1x8x128xbf16>
    %468 = vector.shape_cast %467 : vector<1x8x128xbf16> to vector<8x128xbf16>
    %469 = arith.extf %468 : vector<8x128xbf16> to vector<8x128xf32>
    %470 = arith.truncf %432 : vector<8x32xf32> to vector<8x32xbf16>
    %cst_133 = arith.constant dense<0.000000e+00> : vector<8x128xf32>
    %471 = tpu.matmul %470, %23, %cst_133 {dimension_numbers = #tpu.dot_dimension_numbers<[1], [0], [0], [1], [0, 0, 1, 1], [], []>} : vector<8x32xbf16>, vector<32x128xbf16>, vector<8x128xf32> -> vector<8x128xf32>
    %472 = arith.addf %469, %471 : vector<8x128xf32>
    %473 = arith.mulf %472, %8 : vector<8x128xf32>
    %474 = math.tanh %473 : vector<8x128xf32>
    %475 = arith.mulf %8, %474 : vector<8x128xf32>
    %476 = arith.addf %475, %11 : vector<8x128xf32>
    %477 = vector.extract_strided_slice %476 {offsets = [0, 0], sizes = [8, 32], strides = [1, 1]} : vector<8x128xf32> to vector<8x32xf32>
    %478 = vector.extract_strided_slice %476 {offsets = [0, 32], sizes = [8, 32], strides = [1, 1]} : vector<8x128xf32> to vector<8x32xf32>
    %479 = vector.extract_strided_slice %476 {offsets = [0, 64], sizes = [8, 32], strides = [1, 1]} : vector<8x128xf32> to vector<8x32xf32>
    %480 = vector.extract_strided_slice %476 {offsets = [0, 96], sizes = [8, 32], strides = [1, 1]} : vector<8x128xf32> to vector<8x32xf32>
    %481 = arith.mulf %478, %433 : vector<8x32xf32>
    %482 = arith.mulf %477, %479 : vector<8x32xf32>
    %483 = arith.addf %481, %482 : vector<8x32xf32>
    %484 = math.tanh %483 : vector<8x32xf32>
    %485 = arith.mulf %480, %484 : vector<8x32xf32>
    %486 = arith.select %463, %485, %432 : vector<8x32xf32>
    %487 = arith.select %463, %483, %433 : vector<8x32xf32>
    %c1_i32_134 = arith.constant 1 : i32
    %488 = arith.subi %c8_i32_125, %c1_i32_134 : i32
    %c0_i32_135 = arith.constant 0 : i32
    %489 = arith.cmpi sge, %488, %c0_i32_135 : i32
    %c8_i32_136 = arith.constant 8 : i32
    %490 = arith.cmpi slt, %488, %c8_i32_136 : i32
    %491 = arith.andi %489, %490 : i1
    %492 = arith.truncf %432 : vector<8x32xf32> to vector<8x32xbf16>
    %cst_137 = arith.constant dense<0.000000e+00> : vector<8x128xf32>
    %493 = tpu.matmul %492, %25, %cst_137 {dimension_numbers = #tpu.dot_dimension_numbers<[1], [0], [0], [1], [0, 0, 1, 1], [], []>} : vector<8x32xbf16>, vector<32x128xbf16>, vector<8x128xf32> -> vector<8x128xf32>
    %494 = vector.broadcast %26 : vector<1x128xf32> to vector<8x128xf32>
    %495 = arith.addf %493, %494 : vector<8x128xf32>
    %496 = arith.truncf %458 : vector<8x32xf32> to vector<8x32xbf16>
    %cst_138 = arith.constant dense<0.000000e+00> : vector<8x128xf32>
    %497 = tpu.matmul %496, %24, %cst_138 {dimension_numbers = #tpu.dot_dimension_numbers<[1], [0], [0], [1], [0, 0, 1, 1], [], []>} : vector<8x32xbf16>, vector<32x128xbf16>, vector<8x128xf32> -> vector<8x128xf32>
    %498 = arith.addf %495, %497 : vector<8x128xf32>
    %499 = arith.mulf %498, %8 : vector<8x128xf32>
    %500 = math.tanh %499 : vector<8x128xf32>
    %501 = arith.mulf %8, %500 : vector<8x128xf32>
    %502 = arith.addf %501, %11 : vector<8x128xf32>
    %503 = vector.extract_strided_slice %502 {offsets = [0, 0], sizes = [8, 32], strides = [1, 1]} : vector<8x128xf32> to vector<8x32xf32>
    %504 = vector.extract_strided_slice %502 {offsets = [0, 32], sizes = [8, 32], strides = [1, 1]} : vector<8x128xf32> to vector<8x32xf32>
    %505 = vector.extract_strided_slice %502 {offsets = [0, 64], sizes = [8, 32], strides = [1, 1]} : vector<8x128xf32> to vector<8x32xf32>
    %506 = vector.extract_strided_slice %502 {offsets = [0, 96], sizes = [8, 32], strides = [1, 1]} : vector<8x128xf32> to vector<8x32xf32>
    %507 = arith.mulf %504, %459 : vector<8x32xf32>
    %508 = arith.mulf %503, %505 : vector<8x32xf32>
    %509 = arith.addf %507, %508 : vector<8x32xf32>
    %510 = math.tanh %509 : vector<8x32xf32>
    %511 = arith.mulf %506, %510 : vector<8x32xf32>
    %512 = arith.select %491, %511, %458 : vector<8x32xf32>
    %513 = arith.select %491, %509, %459 : vector<8x32xf32>
    %c9_i32 = arith.constant 9 : i32
    %c0_139 = arith.constant 0 : index
    %c0_140 = arith.constant 0 : index
    %c0_141 = arith.constant 0 : index
    %514 = vector.load %arg11[%c0_139, %c0_140, %c0_141] : memref<2x8x32xf32, #tpu.memory_space<vmem>>, vector<1x8x32xf32>
    %515 = vector.shape_cast %514 : vector<1x8x32xf32> to vector<8x32xf32>
    %516 = vector.shape_cast %486 : vector<8x32xf32> to vector<1x8x32xf32>
    tpu.vector_store %arg11[%c0_139, %c0_140, %c0_141], %516 {strides = array<i32>} : memref<2x8x32xf32, #tpu.memory_space<vmem>>, vector<1x8x32xf32>,
    %c0_142 = arith.constant 0 : index
    %c0_143 = arith.constant 0 : index
    %c0_144 = arith.constant 0 : index
    %517 = vector.load %arg12[%c0_142, %c0_143, %c0_144] : memref<2x8x32xf32, #tpu.memory_space<vmem>>, vector<1x8x32xf32>
    %518 = vector.shape_cast %517 : vector<1x8x32xf32> to vector<8x32xf32>
    %519 = vector.shape_cast %487 : vector<8x32xf32> to vector<1x8x32xf32>
    tpu.vector_store %arg12[%c0_142, %c0_143, %c0_144], %519 {strides = array<i32>} : memref<2x8x32xf32, #tpu.memory_space<vmem>>, vector<1x8x32xf32>,
    %c1 = arith.constant 1 : index
    %c0_145 = arith.constant 0 : index
    %c0_146 = arith.constant 0 : index
    %520 = vector.load %arg11[%c1, %c0_145, %c0_146] : memref<2x8x32xf32, #tpu.memory_space<vmem>>, vector<1x8x32xf32>
    %521 = vector.shape_cast %520 : vector<1x8x32xf32> to vector<8x32xf32>
    %522 = vector.shape_cast %512 : vector<8x32xf32> to vector<1x8x32xf32>
    tpu.vector_store %arg11[%c1, %c0_145, %c0_146], %522 {strides = array<i32>} : memref<2x8x32xf32, #tpu.memory_space<vmem>>, vector<1x8x32xf32>,
    %c1_147 = arith.constant 1 : index
    %c0_148 = arith.constant 0 : index
    %c0_149 = arith.constant 0 : index
    %523 = vector.load %arg12[%c1_147, %c0_148, %c0_149] : memref<2x8x32xf32, #tpu.memory_space<vmem>>, vector<1x8x32xf32>
    %524 = vector.shape_cast %523 : vector<1x8x32xf32> to vector<8x32xf32>
    %525 = vector.shape_cast %513 : vector<8x32xf32> to vector<1x8x32xf32>
    tpu.vector_store %arg12[%c1_147, %c0_148, %c0_149], %525 {strides = array<i32>} : memref<2x8x32xf32, #tpu.memory_space<vmem>>, vector<1x8x32xf32>,
    %526 = arith.truncf %512 : vector<8x32xf32> to vector<8x32xbf16>
    %c0_150 = arith.constant 0 : index
    %c0_151 = arith.constant 0 : index
    %527 = vector.load %arg8[%c0_150, %c0_151] : memref<32x128xbf16, #tpu.memory_space<vmem>>, vector<32x128xbf16>
    %cst_152 = arith.constant dense<0.000000e+00> : vector<8x128xf32>
    %528 = tpu.matmul %526, %527, %cst_152 {dimension_numbers = #tpu.dot_dimension_numbers<[1], [0], [0], [1], [0, 0, 1, 1], [], []>} : vector<8x32xbf16>, vector<32x128xbf16>, vector<8x128xf32> -> vector<8x128xf32>
    %c0_153 = arith.constant 0 : index
    %c0_154 = arith.constant 0 : index
    %529 = vector.load %arg9[%c0_153, %c0_154] : memref<1x128xf32, #tpu.memory_space<vmem>>, vector<1x128xf32>
    %530 = vector.broadcast %529 : vector<1x128xf32> to vector<8x128xf32>
    %531 = arith.addf %528, %530 : vector<8x128xf32>
    %532 = arith.negf %531 : vector<8x128xf32>
    %533 = math.exp %532 : vector<8x128xf32>
    %cst_155 = arith.constant 1.000000e+00 : f32
    %534 = vector.broadcast %cst_155 : f32 to vector<8x128xf32>
    %535 = arith.addf %534, %533 : vector<8x128xf32>
    %536 = arith.divf %534, %535 : vector<8x128xf32>
    %c0_156 = arith.constant 0 : index
    %c0_157 = arith.constant 0 : index
    %537 = vector.load %arg10[%c0_156, %c0_157] : memref<8x128xf32, #tpu.memory_space<vmem>>, vector<8x128xf32>
    tpu.vector_store %arg10[%c0_156, %c0_157], %536 {strides = array<i32>} : memref<8x128xf32, #tpu.memory_space<vmem>>, vector<8x128xf32>,
    return
  }
  func.func @transform_0(%arg0: i32) -> (i32, i32, i32) {
    %c0_i32 = arith.constant 0 : i32
    %c0_i32_0 = arith.constant 0 : i32
    %c0_i32_1 = arith.constant 0 : i32
    %c0_i32_2 = arith.constant 0 : i32
    return %c0_i32, %c0_i32_0, %c0_i32_1 : i32, i32, i32
  }
  func.func @transform_1(%arg0: i32) -> (i32, i32) {
    %c0_i32 = arith.constant 0 : i32
    %c0_i32_0 = arith.constant 0 : i32
    %c0_i32_1 = arith.constant 0 : i32
    return %c0_i32, %c0_i32_0 : i32, i32
  }
  func.func @transform_2(%arg0: i32) -> (i32, i32) {
    %c0_i32 = arith.constant 0 : i32
    %c0_i32_0 = arith.constant 0 : i32
    %c0_i32_1 = arith.constant 0 : i32
    return %c0_i32, %c0_i32_0 : i32, i32
  }
  func.func @transform_3(%arg0: i32) -> (i32, i32) {
    %c0_i32 = arith.constant 0 : i32
    %c0_i32_0 = arith.constant 0 : i32
    %c0_i32_1 = arith.constant 0 : i32
    return %c0_i32, %c0_i32_0 : i32, i32
  }
  func.func @transform_4(%arg0: i32) -> (i32, i32) {
    %c0_i32 = arith.constant 0 : i32
    %c0_i32_0 = arith.constant 0 : i32
    %c0_i32_1 = arith.constant 0 : i32
    return %c0_i32, %c0_i32_0 : i32, i32
  }
  func.func @transform_5(%arg0: i32) -> (i32, i32) {
    %c0_i32 = arith.constant 0 : i32
    %c0_i32_0 = arith.constant 0 : i32
    %c0_i32_1 = arith.constant 0 : i32
    return %c0_i32, %c0_i32_0 : i32, i32
  }
  func.func @transform_6(%arg0: i32) -> (i32, i32) {
    %c0_i32 = arith.constant 0 : i32
    %c0_i32_0 = arith.constant 0 : i32
    %c0_i32_1 = arith.constant 0 : i32
    return %c0_i32, %c0_i32_0 : i32, i32
  }
  func.func @transform_7(%arg0: i32) -> (i32, i32) {
    %c0_i32 = arith.constant 0 : i32
    %c0_i32_0 = arith.constant 0 : i32
    %c0_i32_1 = arith.constant 0 : i32
    return %c0_i32, %c0_i32_0 : i32, i32
  }
  func.func @transform_8(%arg0: i32) -> (i32, i32) {
    %c0_i32 = arith.constant 0 : i32
    %c0_i32_0 = arith.constant 0 : i32
    %c0_i32_1 = arith.constant 0 : i32
    return %c0_i32, %c0_i32_0 : i32, i32
  }
  func.func @transform_9(%arg0: i32) -> (i32, i32) {
    %c0_i32 = arith.constant 0 : i32
    %c0_i32_0 = arith.constant 0 : i32
    %c0_i32_1 = arith.constant 0 : i32
    return %c0_i32, %c0_i32_0 : i32, i32
  }
  func.func @transform_10(%arg0: i32) -> (i32, i32, i32) {
    %c0_i32 = arith.constant 0 : i32
    %c0_i32_0 = arith.constant 0 : i32
    %c0_i32_1 = arith.constant 0 : i32
    %c0_i32_2 = arith.constant 0 : i32
    return %c0_i32, %c0_i32_0, %c0_i32_1 : i32, i32, i32
  }
  func.func @transform_11(%arg0: i32) -> (i32, i32, i32) {
    %c0_i32 = arith.constant 0 : i32
    %c0_i32_0 = arith.constant 0 : i32
    %c0_i32_1 = arith.constant 0 : i32
    %c0_i32_2 = arith.constant 0 : i32
    return %c0_i32, %c0_i32_0, %c0_i32_1 : i32, i32, i32
  }
}

</mosaic_0001>

<llo_original>
// kernel: sentiment_lstm_forward.1
$region0: #{sentiment_lstm_forward.1}
  #allocation0 [shape = 'u32[]', space=smem, size = 0x4, offset = 0x4, fixed_abs, tag = 'smem constant byte address 0x4 - core index']
  #allocation1 [shape = 'u32[144,128]{1,0:T(1,128)}', space=vmem, size = 0x12000, scoped, tag = 'internal scratch']
  #allocation2 [shape = 'bf16[8,8,128]{2,1,0:T(8,128)(2,1)}', space=vmem, size = 0x4000, scoped, tag = 'scratch operand']
  %s0 = inlined_call_operand.vmem [shape: f32[8,8,32], index: 0, kind: input, shape index: {}]
  %s1 = inlined_call_operand.vmem [shape: bf16[32,128], index: 1, kind: input, shape index: {}]
  %s2 = inlined_call_operand.vmem [shape: bf16[32,128], index: 2, kind: input, shape index: {}]
  %s3 = inlined_call_operand.vmem [shape: f32[1,128], index: 3, kind: input, shape index: {}]
  %s4 = inlined_call_operand.vmem [shape: bf16[32,128], index: 4, kind: input, shape index: {}]
  %s5 = inlined_call_operand.vmem [shape: bf16[32,128], index: 5, kind: input, shape index: {}]
  %s6 = inlined_call_operand.vmem [shape: f32[1,128], index: 6, kind: input, shape index: {}]
  %s7 = inlined_call_operand.vmem [shape: bf16[32,128], index: 7, kind: input, shape index: {}]
  %s8 = inlined_call_operand.vmem [shape: f32[1,128], index: 8, kind: input, shape index: {}]
  %s9 = inlined_call_operand.vmem [shape: f32[8,128], index: 9, kind: output, shape index: {0}]
  %s10 = inlined_call_operand.vmem [shape: f32[2,8,32], index: 10, kind: output, shape index: {1}]
  %s11 = inlined_call_operand.vmem [shape: f32[2,8,32], index: 11, kind: output, shape index: {2}]
  %12 = xla_tuple %s9, %s10, %s11
  %s13 = sld [smem:[#allocation0]]
  $region62: #{sentiment_lstm_forward.1} parent=0
    _
  %s15 = ssub.s32 1, %s13
  %s16 = scalar_select 0, %s15, %s13
  // Predicated region
  $region2: #{sentiment_lstm_forward.1} parent=0 // pred_check
    _
  $region3: #{sentiment_lstm_forward.1} parent=0 // pred_check_branch
    %18 = sbr.rel (0) target = $region5
  $region4: #{sentiment_lstm_forward.1} parent=0 // pred_region
    _
  $region5: #{sentiment_lstm_forward.1} parent=0 // pred_fallthru
    _
  // Predicated region
  $region6: #{sentiment_lstm_forward.1} parent=0 // pred_check
    _
  $region7: #{sentiment_lstm_forward.1} parent=0 // pred_check_branch
    %20 = sbr.rel (0) target = $region9
  $region8: #{sentiment_lstm_forward.1} parent=0 // pred_region
    _
  $region9: #{sentiment_lstm_forward.1} parent=0 // pred_fallthru
    _
  // Predicated region
  $region10: #{sentiment_lstm_forward.1} parent=0 // pred_check
    _
  $region11: #{sentiment_lstm_forward.1} parent=0 // pred_check_branch
    %22 = sbr.rel (0) target = $region13
  $region12: #{sentiment_lstm_forward.1} parent=0 // pred_region
    _
  $region13: #{sentiment_lstm_forward.1} parent=0 // pred_fallthru
    _
  // Predicated region
  $region14: #{sentiment_lstm_forward.1} parent=0 // pred_check
    _
  $region15: #{sentiment_lstm_forward.1} parent=0 // pred_check_branch
    %24 = sbr.rel (0) target = $region17
  $region16: #{sentiment_lstm_forward.1} parent=0 // pred_region
    _
  $region17: #{sentiment_lstm_forward.1} parent=0 // pred_fallthru
    _
  // Predicated region
  $region18: #{sentiment_lstm_forward.1} parent=0 // pred_check
    _
  $region19: #{sentiment_lstm_forward.1} parent=0 // pred_check_branch
    %26 = sbr.rel (0) target = $region21
  $region20: #{sentiment_lstm_forward.1} parent=0 // pred_region
    _
  $region21: #{sentiment_lstm_forward.1} parent=0 // pred_fallthru
    _
  // Predicated region
  $region22: #{sentiment_lstm_forward.1} parent=0 // pred_check
    _
  $region23: #{sentiment_lstm_forward.1} parent=0 // pred_check_branch
    %28 = sbr.rel (0) target = $region25
  $region24: #{sentiment_lstm_forward.1} parent=0 // pred_region
    _
  $region25: #{sentiment_lstm_forward.1} parent=0 // pred_fallthru
    _
  // Predicated region
  $region26: #{sentiment_lstm_forward.1} parent=0 // pred_check
    _
  $region27: #{sentiment_lstm_forward.1} parent=0 // pred_check_branch
    %30 = sbr.rel (0) target = $region29
  $region28: #{sentiment_lstm_forward.1} parent=0 // pred_region
    _
  $region29: #{sentiment_lstm_forward.1} parent=0 // pred_fallthru
    _
  // Predicated region
  $region30: #{sentiment_lstm_forward.1} parent=0 // pred_check
    _
  $region31: #{sentiment_lstm_forward.1} parent=0 // pred_check_branch
    %32 = sbr.rel (0) target = $region33
  $region32: #{sentiment_lstm_forward.1} parent=0 // pred_region
    _
  $region33: #{sentiment_lstm_forward.1} parent=0 // pred_fallthru
    _
  // Predicated region
  $region34: #{sentiment_lstm_forward.1} parent=0 // pred_check
    _
  $region35: #{sentiment_lstm_forward.1} parent=0 // pred_check_branch
    %34 = sbr.rel (0) target = $region37
  $region36: #{sentiment_lstm_forward.1} parent=0 // pred_region
    _
  $region37: #{sentiment_lstm_forward.1} parent=0 // pred_fallthru
    _
  %v36 = vlaneseq
  %v37 = vand.u32 %v36, 127
  %vm38 = vcmp.ge.s32.totalorder %v37, 64
  %vm39 = vcmp.lt.s32.totalorder %v37, 96
  %vm40 = vmand %vm38, %vm39
  %v41 = vsel %vm40, 1.0, 0.5
  %v42 = vsel %vm40, 0.0, 0.5
  %v43 = vld [vmem:[%s0] sm:$0xff]
  %v44 = vld [vmem:[%s0 + $0x8] sm:$0xff]
  %v45 = vld [vmem:[%s0 + $0x10] sm:$0xff]
  %v46 = vld [vmem:[%s0 + $0x18] sm:$0xff]
  %v47 = vld [vmem:[%s0 + $0x20] sm:$0xff]
  %v48 = vld [vmem:[%s0 + $0x28] sm:$0xff]
  %v49 = vld [vmem:[%s0 + $0x30] sm:$0xff]
  %v50 = vld [vmem:[%s0 + $0x38] sm:$0xff]
  %v51 = vpack.c.bf16 %v44, %v43
  %v52 = vpack.c.bf16 %v46, %v45
  %v53 = vpack.c.bf16 %v48, %v47
  %v54 = vpack.c.bf16 %v50, %v49
  %v55 = vld [vmem:[%s1] sm:$0xf]
  %v56 = vld [vmem:[%s1 + $0x4] sm:$0xf]
  %v57 = vld [vmem:[%s1 + $0x8] sm:$0xf]
  %v58 = vld [vmem:[%s1 + $0xc] sm:$0xf]
  %v59 = vld [vmem:[%s3] sm:$0x1]
  %v61 = vlaneseq
  %v62 = vshrl.u32 %v61, 7
  %v63 = vsub.s32 0, %v62
  %v64 = vrot.slane %v59, %v63
  %v70 = vunpack.c.l.b16 %v55
  %v71 = vunpack.c.l.b16 %v56
  %v72 = vunpack.c.l.b16 %v57
  %v73 = vunpack.c.l.b16 %v58
  %v74 = vpack.c.b16 %v71, %v70
  %v75 = vpack.c.b16 %v73, %v72
  %vm78 = vcmask 261120
  %v80 = vsel %vm78, %v51, 0
  %v83 = vsel %vm78, %v52, 0
  %v86 = vsel %vm78, %v53, 0
  %v89 = vsel %vm78, %v54, 0
  %91 = vmatprep.subr.bf16.mxu0 0
  %92 = vmatpush1.bf16.msra.mxu0 %v74
  %93 = vmatprep.subr.bf16.mxu0 0
  %94 = vmatpush1.bf16.msra.mxu0 %v75
  %95 = vmatprep.subr.bf16.mxu0 0
  %96 = vmatpush1.bf16.msra.mxu0 0
  %97 = vmatprep.subr.bf16.mxu0 0
  %98 = vmatpush1.bf16.msra.mxu0 0
  %99 = vmatprep.subr.bf16.mxu0 0
  %100 = vmatpush1.bf16.msra.mxu0 0
  %101 = vmatprep.subr.bf16.mxu0 0
  %102 = vmatpush1.bf16.msra.mxu0 0
  %103 = vmatprep.subr.bf16.mxu0 0
  %104 = vmatpush1.bf16.msra.mxu0 0
  %105 = vmatprep.subr.bf16.mxu0 0
  %106 = vmatpush1.bf16.msra.mxu0 0
  %107 = vmatprep.subr.bf16.mxu0 0
  %108 = vmatpush1.bf16.msra.mxu0 0
  %109 = vmatprep.subr.bf16.mxu0 0
  %110 = vmatpush1.bf16.msra.mxu0 0
  %111 = vmatprep.subr.bf16.mxu0 0
  %112 = vmatpush1.bf16.msra.mxu0 0
  %113 = vmatprep.subr.bf16.mxu0 0
  %114 = vmatpush1.bf16.msra.mxu0 0
  %115 = vmatprep.subr.bf16.mxu0 0
  %116 = vmatpush1.bf16.msra.mxu0 0
  %117 = vmatprep.subr.bf16.mxu0 0
  %118 = vmatpush1.bf16.msra.mxu0 0
  %119 = vmatprep.subr.bf16.mxu0 0
  %120 = vmatpush1.bf16.msra.mxu0 0
  %121 = vmatprep.subr.bf16.mxu0 0
  %122 = vmatpush1.bf16.msra.mxu0 0
  %123 = vmatprep.mubr.bf16.mxu0 0
  %124 = vmatmul.mubr.bf16.gmra.mrb[0].mxu0 %v80
  %v125 = vpop.f32.mrb[0].mxu0
  %v126 = vadd.f32 %v64, %v125
  %v127 = vpop.f32.mrb[0].mxu0
  %v128 = vpop.f32.mrb[0].mxu0
  %v129 = vadd.f32 %v64, %v128
  %v130 = vpop.f32.mrb[0].mxu0
  %131 = vmatprep.mubr.bf16.mxu0 0
  %132 = vmatmul.mubr.bf16.gmra.mrb[0].mxu0 %v83
  %v133 = vpop.f32.mrb[0].mxu0
  %v134 = vadd.f32 %v64, %v133
  %v135 = vpop.f32.mrb[0].mxu0
  %v136 = vpop.f32.mrb[0].mxu0
  %v137 = vadd.f32 %v64, %v136
  %v138 = vpop.f32.mrb[0].mxu0
  %139 = vmatprep.mubr.bf16.mxu0 0
  %140 = vmatmul.mubr.bf16.gmra.mrb[0].mxu0 %v86
  %v141 = vpop.f32.mrb[0].mxu0
  %v142 = vadd.f32 %v64, %v141
  %v143 = vpop.f32.mrb[0].mxu0
  %v144 = vpop.f32.mrb[0].mxu0
  %v145 = vadd.f32 %v64, %v144
  %v146 = vpop.f32.mrb[0].mxu0
  %147 = vmatprep.mubr.bf16.mxu0 0
  %148 = vmatmul.mubr.bf16.gmra.mrb[0].mxu0 %v89
  %v149 = vpop.f32.mrb[0].mxu0
  %v150 = vadd.f32 %v64, %v149
  %v151 = vpop.f32.mrb[0].mxu0
  %v152 = vpop.f32.mrb[0].mxu0
  %v153 = vadd.f32 %v64, %v152
  %v154 = vpop.f32.mrb[0].mxu0
  %155 = vdwg.mxu0
  %v156 = vpack.c.bf16 %v126, %v126
  %v157 = vpack.c.bf16 %v129, %v129
  %v158 = vpack.c.bf16 %v134, %v134
  %v159 = vpack.c.bf16 %v137, %v137
  %v160 = vpack.c.bf16 %v142, %v142
  %v161 = vpack.c.bf16 %v145, %v145
  %v162 = vpack.c.bf16 %v150, %v150
  %v163 = vpack.c.bf16 %v153, %v153
  %164 = vst [vmem:[#allocation2] sm:$0xf] %v156
  %165 = vst [vmem:[#allocation2 + $0x4] sm:$0xf] %v157
  %166 = vst [vmem:[#allocation2 + $0x8] sm:$0xf] %v158
  %167 = vst [vmem:[#allocation2 + $0xc] sm:$0xf] %v159
  %168 = vst [vmem:[#allocation2 + $0x10] sm:$0xf] %v160
  %169 = vst [vmem:[#allocation2 + $0x14] sm:$0xf] %v161
  %170 = vst [vmem:[#allocation2 + $0x18] sm:$0xf] %v162
  %171 = vst [vmem:[#allocation2 + $0x1c] sm:$0xf] %v163
  %v172 = vld [vmem:[%s2] sm:$0xf]
  %v173 = vld [vmem:[%s2 + $0x4] sm:$0xf]
  %v174 = vld [vmem:[%s2 + $0x8] sm:$0xf]
  %v175 = vld [vmem:[%s2 + $0xc] sm:$0xf]
  %v176 = vld [vmem:[%s5] sm:$0xf]
  %v177 = vld [vmem:[%s5 + $0x4] sm:$0xf]
  %v178 = vld [vmem:[%s5 + $0x8] sm:$0xf]
  %v179 = vld [vmem:[%s5 + $0xc] sm:$0xf]
  %v180 = vld [vmem:[%s4] sm:$0xf]
  %v181 = vld [vmem:[%s4 + $0x4] sm:$0xf]
  %v182 = vld [vmem:[%s4 + $0x8] sm:$0xf]
  %v183 = vld [vmem:[%s4 + $0xc] sm:$0xf]
  %v184 = vld [vmem:[%s6] sm:$0x1]
  %v185 = vld [vmem:[#allocation2] sm:$0xf]
  %v186 = vunpack.c.l.bf16 %v185
  %v191 = vunpack.c.l.b16 %v172
  %v192 = vunpack.c.l.b16 %v173
  %v193 = vunpack.c.l.b16 %v174
  %v194 = vunpack.c.l.b16 %v175
  %v195 = vpack.c.b16 %v192, %v191
  %v196 = vpack.c.b16 %v194, %v193
  %v200 = vsel %vm78, 0, 0
  %202 = vmatprep.subr.bf16.mxu0 0
  %203 = vmatpush1.bf16.msra.mxu0 %v195
  %204 = vmatprep.subr.bf16.mxu0 0
  %205 = vmatpush1.bf16.msra.mxu0 %v196
  %206 = vmatprep.subr.bf16.mxu0 0
  %207 = vmatpush1.bf16.msra.mxu0 0
  %208 = vmatprep.subr.bf16.mxu0 0
  %209 = vmatpush1.bf16.msra.mxu0 0
  %210 = vmatprep.subr.bf16.mxu0 0
  %211 = vmatpush1.bf16.msra.mxu0 0
  %212 = vmatprep.subr.bf16.mxu0 0
  %213 = vmatpush1.bf16.msra.mxu0 0
  %214 = vmatprep.subr.bf16.mxu0 0
  %215 = vmatpush1.bf16.msra.mxu0 0
  %216 = vmatprep.subr.bf16.mxu0 0
  %217 = vmatpush1.bf16.msra.mxu0 0
  %218 = vmatprep.subr.bf16.mxu0 0
  %219 = vmatpush1.bf16.msra.mxu0 0
  %220 = vmatprep.subr.bf16.mxu0 0
  %221 = vmatpush1.bf16.msra.mxu0 0
  %222 = vmatprep.subr.bf16.mxu0 0
  %223 = vmatpush1.bf16.msra.mxu0 0
  %224 = vmatprep.subr.bf16.mxu0 0
  %225 = vmatpush1.bf16.msra.mxu0 0
  %226 = vmatprep.subr.bf16.mxu0 0
  %227 = vmatpush1.bf16.msra.mxu0 0
  %228 = vmatprep.subr.bf16.mxu0 0
  %229 = vmatpush1.bf16.msra.mxu0 0
  %230 = vmatprep.subr.bf16.mxu0 0
  %231 = vmatpush1.bf16.msra.mxu0 0
  %232 = vmatprep.subr.bf16.mxu0 0
  %233 = vmatpush1.bf16.msra.mxu0 0
  %234 = vmatprep.mubr.bf16.mxu0 0
  %235 = vmatmul.mubr.bf16.gmra.mrb[0].mxu0 %v200
  %v236 = vpop.f32.mrb[0].mxu0
  %v237 = vadd.f32 0.0, %v236
  %v238 = vpop.f32.mrb[0].mxu0
  %v239 = vpop.f32.mrb[0].mxu0
  %v240 = vpop.f32.mrb[0].mxu0
  %241 = vdwg.mxu0
  %v242 = vadd.f32 %v186, %v237
  %v243 = vmul.f32 %v242, %v41
  %v244 = vtanh.pop %v243
  %v245 = vmul.f32 %v41, %v244
  %v246 = vadd.f32 %v245, %v42
  %v247 = vmul.f32 %v246, 0.0
  %249 = vrot.lane.b32.xlu0 %v246, 64
  %v250 = vpop.permute.xlu0 %249
  %v252 = vmul.f32 %v246, %v250
  %254 = vrot.lane.b32.xlu0 %v252, 32
  %v255 = vpop.permute.xlu0 %254
  %v257 = vadd.f32 %v247, %v255
  %v258 = vtanh.pop %v257
  %260 = vrot.lane.b32.xlu0 %v258, 64
  %v261 = vpop.permute.xlu0 %260
  %v263 = vmul.f32 %v246, %v261
  %s264 = scalar_lea.vmem [#allocation2], 4
  %v265 = vld [vmem:[%s264] sm:$0xf]
  %v266 = vunpack.c.l.bf16 %v265
  %v267 = vpack.c.bf16 %v263, %v263
  %269 = vrot.lane.b32.xlu0 %v267, 32
  %v270 = vpop.permute.xlu0 %269
  %v272 = vsel %vm78, %v270, 0
  %274 = vmatprep.subr.bf16.mxu0 0
  %275 = vmatpush1.bf16.msra.mxu0 %v195
  %276 = vmatprep.subr.bf16.mxu0 0
  %277 = vmatpush1.bf16.msra.mxu0 %v196
  %278 = vmatprep.subr.bf16.mxu0 0
  %279 = vmatpush1.bf16.msra.mxu0 0
  %280 = vmatprep.subr.bf16.mxu0 0
  %281 = vmatpush1.bf16.msra.mxu0 0
  %282 = vmatprep.subr.bf16.mxu0 0
  %283 = vmatpush1.bf16.msra.mxu0 0
  %284 = vmatprep.subr.bf16.mxu0 0
  %285 = vmatpush1.bf16.msra.mxu0 0
  %286 = vmatprep.subr.bf16.mxu0 0
  %287 = vmatpush1.bf16.msra.mxu0 0
  %288 = vmatprep.subr.bf16.mxu0 0
  %289 = vmatpush1.bf16.msra.mxu0 0
  %290 = vmatprep.subr.bf16.mxu0 0
  %291 = vmatpush1.bf16.msra.mxu0 0
  %292 = vmatprep.subr.bf16.mxu0 0
  %293 = vmatpush1.bf16.msra.mxu0 0
  %294 = vmatprep.subr.bf16.mxu0 0
  %295 = vmatpush1.bf16.msra.mxu0 0
  %296 = vmatprep.subr.bf16.mxu0 0
  %297 = vmatpush1.bf16.msra.mxu0 0
  %298 = vmatprep.subr.bf16.mxu0 0
  %299 = vmatpush1.bf16.msra.mxu0 0
  %300 = vmatprep.subr.bf16.mxu0 0
  %301 = vmatpush1.bf16.msra.mxu0 0
  %302 = vmatprep.subr.bf16.mxu0 0
  %303 = vmatpush1.bf16.msra.mxu0 0
  %304 = vmatprep.subr.bf16.mxu0 0
  %305 = vmatpush1.bf16.msra.mxu0 0
  %306 = vmatprep.mubr.bf16.mxu0 0
  %307 = vmatmul.mubr.bf16.gmra.mrb[0].mxu0 %v272
  %v308 = vpop.f32.mrb[0].mxu0
  %v309 = vadd.f32 0.0, %v308
  %v310 = vpop.f32.mrb[0].mxu0
  %v311 = vpop.f32.mrb[0].mxu0
  %v312 = vpop.f32.mrb[0].mxu0
  %313 = vdwg.mxu0
  %v314 = vadd.f32 %v266, %v309
  %v315 = vmul.f32 %v314, %v41
  %v316 = vtanh.pop %v315
  %v317 = vmul.f32 %v41, %v316
  %v318 = vadd.f32 %v317, %v42
  %v319 = vmul.f32 %v318, %v257
  %321 = vrot.lane.b32.xlu0 %v318, 64
  %v322 = vpop.permute.xlu0 %321
  %v324 = vmul.f32 %v318, %v322
  %326 = vrot.lane.b32.xlu0 %v324, 32
  %v327 = vpop.permute.xlu0 %326
  %v329 = vadd.f32 %v319, %v327
  %v330 = vtanh.pop %v329
  %332 = vrot.lane.b32.xlu0 %v330, 64
  %v333 = vpop.permute.xlu0 %332
  %v335 = vmul.f32 %v318, %v333
  %v337 = vlaneseq
  %v338 = vshrl.u32 %v337, 7
  %v339 = vsub.s32 0, %v338
  %v340 = vrot.slane %v184, %v339
  %v346 = vunpack.c.l.b16 %v180
  %v347 = vunpack.c.l.b16 %v181
  %v348 = vunpack.c.l.b16 %v182
  %v349 = vunpack.c.l.b16 %v183
  %v350 = vpack.c.b16 %v347, %v346
  %v351 = vpack.c.b16 %v349, %v348
  %354 = vmatprep.subr.bf16.mxu0 0
  %355 = vmatpush1.bf16.msra.mxu0 %v350
  %356 = vmatprep.subr.bf16.mxu0 0
  %357 = vmatpush1.bf16.msra.mxu0 %v351
  %358 = vmatprep.subr.bf16.mxu0 0
  %359 = vmatpush1.bf16.msra.mxu0 0
  %360 = vmatprep.subr.bf16.mxu0 0
  %361 = vmatpush1.bf16.msra.mxu0 0
  %362 = vmatprep.subr.bf16.mxu0 0
  %363 = vmatpush1.bf16.msra.mxu0 0
  %364 = vmatprep.subr.bf16.mxu0 0
  %365 = vmatpush1.bf16.msra.mxu0 0
  %366 = vmatprep.subr.bf16.mxu0 0
  %367 = vmatpush1.bf16.msra.mxu0 0
  %368 = vmatprep.subr.bf16.mxu0 0
  %369 = vmatpush1.bf16.msra.mxu0 0
  %370 = vmatprep.subr.bf16.mxu0 0
  %371 = vmatpush1.bf16.msra.mxu0 0
  %372 = vmatprep.subr.bf16.mxu0 0
  %373 = vmatpush1.bf16.msra.mxu0 0
  %374 = vmatprep.subr.bf16.mxu0 0
  %375 = vmatpush1.bf16.msra.mxu0 0
  %376 = vmatprep.subr.bf16.mxu0 0
  %377 = vmatpush1.bf16.msra.mxu0 0
  %378 = vmatprep.subr.bf16.mxu0 0
  %379 = vmatpush1.bf16.msra.mxu0 0
  %380 = vmatprep.subr.bf16.mxu0 0
  %381 = vmatpush1.bf16.msra.mxu0 0
  %382 = vmatprep.subr.bf16.mxu0 0
  %383 = vmatpush1.bf16.msra.mxu0 0
  %384 = vmatprep.subr.bf16.mxu0 0
  %385 = vmatpush1.bf16.msra.mxu0 0
  %386 = vmatprep.mubr.bf16.mxu0 0
  %387 = vmatmul.mubr.bf16.gmra.mrb[0].mxu0 %v272
  %v388 = vpop.f32.mrb[0].mxu0
  %v389 = vadd.f32 %v340, %v388
  %v390 = vpop.f32.mrb[0].mxu0
  %v391 = vpop.f32.mrb[0].mxu0
  %v392 = vpop.f32.mrb[0].mxu0
  %393 = vdwg.mxu0
  %v398 = vunpack.c.l.b16 %v176
  %v399 = vunpack.c.l.b16 %v177
  %v400 = vunpack.c.l.b16 %v178
  %v401 = vunpack.c.l.b16 %v179
  %v402 = vpack.c.b16 %v399, %v398
  %v403 = vpack.c.b16 %v401, %v400
  %406 = vmatprep.subr.bf16.mxu0 0
  %407 = vmatpush1.bf16.msra.mxu0 %v402
  %408 = vmatprep.subr.bf16.mxu0 0
  %409 = vmatpush1.bf16.msra.mxu0 %v403
  %410 = vmatprep.subr.bf16.mxu0 0
  %411 = vmatpush1.bf16.msra.mxu0 0
  %412 = vmatprep.subr.bf16.mxu0 0
  %413 = vmatpush1.bf16.msra.mxu0 0
  %414 = vmatprep.subr.bf16.mxu0 0
  %415 = vmatpush1.bf16.msra.mxu0 0
  %416 = vmatprep.subr.bf16.mxu0 0
  %417 = vmatpush1.bf16.msra.mxu0 0
  %418 = vmatprep.subr.bf16.mxu0 0
  %419 = vmatpush1.bf16.msra.mxu0 0
  %420 = vmatprep.subr.bf16.mxu0 0
  %421 = vmatpush1.bf16.msra.mxu0 0
  %422 = vmatprep.subr.bf16.mxu0 0
  %423 = vmatpush1.bf16.msra.mxu0 0
  %424 = vmatprep.subr.bf16.mxu0 0
  %425 = vmatpush1.bf16.msra.mxu0 0
  %426 = vmatprep.subr.bf16.mxu0 0
  %427 = vmatpush1.bf16.msra.mxu0 0
  %428 = vmatprep.subr.bf16.mxu0 0
  %429 = vmatpush1.bf16.msra.mxu0 0
  %430 = vmatprep.subr.bf16.mxu0 0
  %431 = vmatpush1.bf16.msra.mxu0 0
  %432 = vmatprep.subr.bf16.mxu0 0
  %433 = vmatpush1.bf16.msra.mxu0 0
  %434 = vmatprep.subr.bf16.mxu0 0
  %435 = vmatpush1.bf16.msra.mxu0 0
  %436 = vmatprep.subr.bf16.mxu0 0
  %437 = vmatpush1.bf16.msra.mxu0 0
  %438 = vmatprep.mubr.bf16.mxu0 0
  %439 = vmatmul.mubr.bf16.gmra.mrb[0].mxu0 %v200
  %v440 = vpop.f32.mrb[0].mxu0
  %v441 = vadd.f32 0.0, %v440
  %v442 = vpop.f32.mrb[0].mxu0
  %v443 = vpop.f32.mrb[0].mxu0
  %v444 = vpop.f32.mrb[0].mxu0
  %445 = vdwg.mxu0
  %v446 = vadd.f32 %v389, %v441
  %v447 = vmul.f32 %v446, %v41
  %v448 = vtanh.pop %v447
  %v449 = vmul.f32 %v41, %v448
  %v450 = vadd.f32 %v449, %v42
  %v451 = vmul.f32 %v450, 0.0
  %453 = vrot.lane.b32.xlu0 %v450, 64
  %v454 = vpop.permute.xlu0 %453
  %v456 = vmul.f32 %v450, %v454
  %458 = vrot.lane.b32.xlu0 %v456, 32
  %v459 = vpop.permute.xlu0 %458
  %v461 = vadd.f32 %v451, %v459
  %v462 = vtanh.pop %v461
  %464 = vrot.lane.b32.xlu0 %v462, 64
  %v465 = vpop.permute.xlu0 %464
  %v467 = vmul.f32 %v450, %v465
  %s468 = scalar_lea.vmem [#allocation2], 8
  %v469 = vld [vmem:[%s468] sm:$0xf]
  %v470 = vunpack.c.l.bf16 %v469
  %v471 = vpack.c.bf16 %v335, %v335
  %473 = vrot.lane.b32.xlu0 %v471, 32
  %v474 = vpop.permute.xlu0 %473
  %v476 = vsel %vm78, %v474, 0
  %478 = vmatprep.subr.bf16.mxu0 0
  %479 = vmatpush1.bf16.msra.mxu0 %v195
  %480 = vmatprep.subr.bf16.mxu0 0
  %481 = vmatpush1.bf16.msra.mxu0 %v196
  %482 = vmatprep.subr.bf16.mxu0 0
  %483 = vmatpush1.bf16.msra.mxu0 0
  %484 = vmatprep.subr.bf16.mxu0 0
  %485 = vmatpush1.bf16.msra.mxu0 0
  %486 = vmatprep.subr.bf16.mxu0 0
  %487 = vmatpush1.bf16.msra.mxu0 0
  %488 = vmatprep.subr.bf16.mxu0 0
  %489 = vmatpush1.bf16.msra.mxu0 0
  %490 = vmatprep.subr.bf16.mxu0 0
  %491 = vmatpush1.bf16.msra.mxu0 0
  %492 = vmatprep.subr.bf16.mxu0 0
  %493 = vmatpush1.bf16.msra.mxu0 0
  %494 = vmatprep.subr.bf16.mxu0 0
  %495 = vmatpush1.bf16.msra.mxu0 0
  %496 = vmatprep.subr.bf16.mxu0 0
  %497 = vmatpush1.bf16.msra.mxu0 0
  %498 = vmatprep.subr.bf16.mxu0 0
  %499 = vmatpush1.bf16.msra.mxu0 0
  %500 = vmatprep.subr.bf16.mxu0 0
  %501 = vmatpush1.bf16.msra.mxu0 0
  %502 = vmatprep.subr.bf16.mxu0 0
  %503 = vmatpush1.bf16.msra.mxu0 0
  %504 = vmatprep.subr.bf16.mxu0 0
  %505 = vmatpush1.bf16.msra.mxu0 0
  %506 = vmatprep.subr.bf16.mxu0 0
  %507 = vmatpush1.bf16.msra.mxu0 0
  %508 = vmatprep.subr.bf16.mxu0 0
  %509 = vmatpush1.bf16.msra.mxu0 0
  %510 = vmatprep.mubr.bf16.mxu0 0
  %511 = vmatmul.mubr.bf16.gmra.mrb[0].mxu0 %v476
  %v512 = vpop.f32.mrb[0].mxu0
  %v513 = vadd.f32 0.0, %v512
  %v514 = vpop.f32.mrb[0].mxu0
  %v515 = vpop.f32.mrb[0].mxu0
  %v516 = vpop.f32.mrb[0].mxu0
  %517 = vdwg.mxu0
  %v518 = vadd.f32 %v470, %v513
  %v519 = vmul.f32 %v518, %v41
  %v520 = vtanh.pop %v519
  %v521 = vmul.f32 %v41, %v520
  %v522 = vadd.f32 %v521, %v42
  %v523 = vmul.f32 %v522, %v329
  %525 = vrot.lane.b32.xlu0 %v522, 64
  %v526 = vpop.permute.xlu0 %525
  %v528 = vmul.f32 %v522, %v526
  %530 = vrot.lane.b32.xlu0 %v528, 32
  %v531 = vpop.permute.xlu0 %530
  %v533 = vadd.f32 %v523, %v531
  %v534 = vtanh.pop %v533
  %536 = vrot.lane.b32.xlu0 %v534, 64
  %v537 = vpop.permute.xlu0 %536
  %v539 = vmul.f32 %v522, %v537
  %540 = vmatprep.subr.bf16.mxu0 0
  %541 = vmatpush1.bf16.msra.mxu0 %v350
  %542 = vmatprep.subr.bf16.mxu0 0
  %543 = vmatpush1.bf16.msra.mxu0 %v351
  %544 = vmatprep.subr.bf16.mxu0 0
  %545 = vmatpush1.bf16.msra.mxu0 0
  %546 = vmatprep.subr.bf16.mxu0 0
  %547 = vmatpush1.bf16.msra.mxu0 0
  %548 = vmatprep.subr.bf16.mxu0 0
  %549 = vmatpush1.bf16.msra.mxu0 0
  %550 = vmatprep.subr.bf16.mxu0 0
  %551 = vmatpush1.bf16.msra.mxu0 0
  %552 = vmatprep.subr.bf16.mxu0 0
  %553 = vmatpush1.bf16.msra.mxu0 0
  %554 = vmatprep.subr.bf16.mxu0 0
  %555 = vmatpush1.bf16.msra.mxu0 0
  %556 = vmatprep.subr.bf16.mxu0 0
  %557 = vmatpush1.bf16.msra.mxu0 0
  %558 = vmatprep.subr.bf16.mxu0 0
  %559 = vmatpush1.bf16.msra.mxu0 0
  %560 = vmatprep.subr.bf16.mxu0 0
  %561 = vmatpush1.bf16.msra.mxu0 0
  %562 = vmatprep.subr.bf16.mxu0 0
  %563 = vmatpush1.bf16.msra.mxu0 0
  %564 = vmatprep.subr.bf16.mxu0 0
  %565 = vmatpush1.bf16.msra.mxu0 0
  %566 = vmatprep.subr.bf16.mxu0 0
  %567 = vmatpush1.bf16.msra.mxu0 0
  %568 = vmatprep.subr.bf16.mxu0 0
  %569 = vmatpush1.bf16.msra.mxu0 0
  %570 = vmatprep.subr.bf16.mxu0 0
  %571 = vmatpush1.bf16.msra.mxu0 0
  %572 = vmatprep.mubr.bf16.mxu0 0
  %573 = vmatmul.mubr.bf16.gmra.mrb[0].mxu0 %v476
  %v574 = vpop.f32.mrb[0].mxu0
  %v575 = vadd.f32 %v340, %v574
  %v576 = vpop.f32.mrb[0].mxu0
  %v577 = vpop.f32.mrb[0].mxu0
  %v578 = vpop.f32.mrb[0].mxu0
  %579 = vdwg.mxu0
  %v580 = vpack.c.bf16 %v467, %v467
  %582 = vrot.lane.b32.xlu0 %v580, 32
  %v583 = vpop.permute.xlu0 %582
  %v585 = vsel %vm78, %v583, 0
  %587 = vmatprep.subr.bf16.mxu0 0
  %588 = vmatpush1.bf16.msra.mxu0 %v402
  %589 = vmatprep.subr.bf16.mxu0 0
  %590 = vmatpush1.bf16.msra.mxu0 %v403
  %591 = vmatprep.subr.bf16.mxu0 0
  %592 = vmatpush1.bf16.msra.mxu0 0
  %593 = vmatprep.subr.bf16.mxu0 0
  %594 = vmatpush1.bf16.msra.mxu0 0
  %595 = vmatprep.subr.bf16.mxu0 0
  %596 = vmatpush1.bf16.msra.mxu0 0
  %597 = vmatprep.subr.bf16.mxu0 0
  %598 = vmatpush1.bf16.msra.mxu0 0
  %599 = vmatprep.subr.bf16.mxu0 0
  %600 = vmatpush1.bf16.msra.mxu0 0
  %601 = vmatprep.subr.bf16.mxu0 0
  %602 = vmatpush1.bf16.msra.mxu0 0
  %603 = vmatprep.subr.bf16.mxu0 0
  %604 = vmatpush1.bf16.msra.mxu0 0
  %605 = vmatprep.subr.bf16.mxu0 0
  %606 = vmatpush1.bf16.msra.mxu0 0
  %607 = vmatprep.subr.bf16.mxu0 0
  %608 = vmatpush1.bf16.msra.mxu0 0
  %609 = vmatprep.subr.bf16.mxu0 0
  %610 = vmatpush1.bf16.msra.mxu0 0
  %611 = vmatprep.subr.bf16.mxu0 0
  %612 = vmatpush1.bf16.msra.mxu0 0
  %613 = vmatprep.subr.bf16.mxu0 0
  %614 = vmatpush1.bf16.msra.mxu0 0
  %615 = vmatprep.subr.bf16.mxu0 0
  %616 = vmatpush1.bf16.msra.mxu0 0
  %617 = vmatprep.subr.bf16.mxu0 0
  %618 = vmatpush1.bf16.msra.mxu0 0
  %619 = vmatprep.mubr.bf16.mxu0 0
  %620 = vmatmul.mubr.bf16.gmra.mrb[0].mxu0 %v585
  %v621 = vpop.f32.mrb[0].mxu0
  %v622 = vadd.f32 0.0, %v621
  %v623 = vpop.f32.mrb[0].mxu0
  %v624 = vpop.f32.mrb[0].mxu0
  %v625 = vpop.f32.mrb[0].mxu0
  %626 = vdwg.mxu0
  %v627 = vadd.f32 %v575, %v622
  %v628 = vmul.f32 %v627, %v41
  %v629 = vtanh.pop %v628
  %v630 = vmul.f32 %v41, %v629
  %v631 = vadd.f32 %v630, %v42
  %v632 = vmul.f32 %v631, %v461
  %634 = vrot.lane.b32.xlu0 %v631, 64
  %v635 = vpop.permute.xlu0 %634
  %v637 = vmul.f32 %v631, %v635
  %639 = vrot.lane.b32.xlu0 %v637, 32
  %v640 = vpop.permute.xlu0 %639
  %v642 = vadd.f32 %v632, %v640
  %v643 = vtanh.pop %v642
  %645 = vrot.lane.b32.xlu0 %v643, 64
  %v646 = vpop.permute.xlu0 %645
  %v648 = vmul.f32 %v631, %v646
  %s649 = scalar_lea.vmem [#allocation2], 12
  %v650 = vld [vmem:[%s649] sm:$0xf]
  %v651 = vunpack.c.l.bf16 %v650
  %v652 = vpack.c.bf16 %v539, %v539
  %654 = vrot.lane.b32.xlu0 %v652, 32
  %v655 = vpop.permute.xlu0 %654
  %v657 = vsel %vm78, %v655, 0
  %659 = vmatprep.subr.bf16.mxu0 0
  %660 = vmatpush1.bf16.msra.mxu0 %v195
  %661 = vmatprep.subr.bf16.mxu0 0
  %662 = vmatpush1.bf16.msra.mxu0 %v196
  %663 = vmatprep.subr.bf16.mxu0 0
  %664 = vmatpush1.bf16.msra.mxu0 0
  %665 = vmatprep.subr.bf16.mxu0 0
  %666 = vmatpush1.bf16.msra.mxu0 0
  %667 = vmatprep.subr.bf16.mxu0 0
  %668 = vmatpush1.bf16.msra.mxu0 0
  %669 = vmatprep.subr.bf16.mxu0 0
  %670 = vmatpush1.bf16.msra.mxu0 0
  %671 = vmatprep.subr.bf16.mxu0 0
  %672 = vmatpush1.bf16.msra.mxu0 0
  %673 = vmatprep.subr.bf16.mxu0 0
  %674 = vmatpush1.bf16.msra.mxu0 0
  %675 = vmatprep.subr.bf16.mxu0 0
  %676 = vmatpush1.bf16.msra.mxu0 0
  %677 = vmatprep.subr.bf16.mxu0 0
  %678 = vmatpush1.bf16.msra.mxu0 0
  %679 = vmatprep.subr.bf16.mxu0 0
  %680 = vmatpush1.bf16.msra.mxu0 0
  %681 = vmatprep.subr.bf16.mxu0 0
  %682 = vmatpush1.bf16.msra.mxu0 0
  %683 = vmatprep.subr.bf16.mxu0 0
  %684 = vmatpush1.bf16.msra.mxu0 0
  %685 = vmatprep.subr.bf16.mxu0 0
  %686 = vmatpush1.bf16.msra.mxu0 0
  %687 = vmatprep.subr.bf16.mxu0 0
  %688 = vmatpush1.bf16.msra.mxu0 0
  %689 = vmatprep.subr.bf16.mxu0 0
  %690 = vmatpush1.bf16.msra.mxu0 0
  %691 = vmatprep.mubr.bf16.mxu0 0
  %692 = vmatmul.mubr.bf16.gmra.mrb[0].mxu0 %v657
  %v693 = vpop.f32.mrb[0].mxu0
  %v694 = vadd.f32 0.0, %v693
  %v695 = vpop.f32.mrb[0].mxu0
  %v696 = vpop.f32.mrb[0].mxu0
  %v697 = vpop.f32.mrb[0].mxu0
  %698 = vdwg.mxu0
  %v699 = vadd.f32 %v651, %v694
  %v700 = vmul.f32 %v699, %v41
  %v701 = vtanh.pop %v700
  %v702 = vmul.f32 %v41, %v701
  %v703 = vadd.f32 %v702, %v42
  %v704 = vmul.f32 %v703, %v533
  %706 = vrot.lane.b32.xlu0 %v703, 64
  %v707 = vpop.permute.xlu0 %706
  %v709 = vmul.f32 %v703, %v707
  %711 = vrot.lane.b32.xlu0 %v709, 32
  %v712 = vpop.permute.xlu0 %711
  %v714 = vadd.f32 %v704, %v712
  %v715 = vtanh.pop %v714
  %717 = vrot.lane.b32.xlu0 %v715, 64
  %v718 = vpop.permute.xlu0 %717
  %v720 = vmul.f32 %v703, %v718
  %721 = vmatprep.subr.bf16.mxu0 0
  %722 = vmatpush1.bf16.msra.mxu0 %v350
  %723 = vmatprep.subr.bf16.mxu0 0
  %724 = vmatpush1.bf16.msra.mxu0 %v351
  %725 = vmatprep.subr.bf16.mxu0 0
  %726 = vmatpush1.bf16.msra.mxu0 0
  %727 = vmatprep.subr.bf16.mxu0 0
  %728 = vmatpush1.bf16.msra.mxu0 0
  %729 = vmatprep.subr.bf16.mxu0 0
  %730 = vmatpush1.bf16.msra.mxu0 0
  %731 = vmatprep.subr.bf16.mxu0 0
  %732 = vmatpush1.bf16.msra.mxu0 0
  %733 = vmatprep.subr.bf16.mxu0 0
  %734 = vmatpush1.bf16.msra.mxu0 0
  %735 = vmatprep.subr.bf16.mxu0 0
  %736 = vmatpush1.bf16.msra.mxu0 0
  %737 = vmatprep.subr.bf16.mxu0 0
  %738 = vmatpush1.bf16.msra.mxu0 0
  %739 = vmatprep.subr.bf16.mxu0 0
  %740 = vmatpush1.bf16.msra.mxu0 0
  %741 = vmatprep.subr.bf16.mxu0 0
  %742 = vmatpush1.bf16.msra.mxu0 0
  %743 = vmatprep.subr.bf16.mxu0 0
  %744 = vmatpush1.bf16.msra.mxu0 0
  %745 = vmatprep.subr.bf16.mxu0 0
  %746 = vmatpush1.bf16.msra.mxu0 0
  %747 = vmatprep.subr.bf16.mxu0 0
  %748 = vmatpush1.bf16.msra.mxu0 0
  %749 = vmatprep.subr.bf16.mxu0 0
  %750 = vmatpush1.bf16.msra.mxu0 0
  %751 = vmatprep.subr.bf16.mxu0 0
  %752 = vmatpush1.bf16.msra.mxu0 0
  %753 = vmatprep.mubr.bf16.mxu0 0
  %754 = vmatmul.mubr.bf16.gmra.mrb[0].mxu0 %v657
  %v755 = vpop.f32.mrb[0].mxu0
  %v756 = vadd.f32 %v340, %v755
  %v757 = vpop.f32.mrb[0].mxu0
  %v758 = vpop.f32.mrb[0].mxu0
  %v759 = vpop.f32.mrb[0].mxu0
  %760 = vdwg.mxu0
  %v761 = vpack.c.bf16 %v648, %v648
  %763 = vrot.lane.b32.xlu0 %v761, 32
  %v764 = vpop.permute.xlu0 %763
  %v766 = vsel %vm78, %v764, 0
  %768 = vmatprep.subr.bf16.mxu0 0
  %769 = vmatpush1.bf16.msra.mxu0 %v402
  %770 = vmatprep.subr.bf16.mxu0 0
  %771 = vmatpush1.bf16.msra.mxu0 %v403
  %772 = vmatprep.subr.bf16.mxu0 0
  %773 = vmatpush1.bf16.msra.mxu0 0
  %774 = vmatprep.subr.bf16.mxu0 0
  %775 = vmatpush1.bf16.msra.mxu0 0
  %776 = vmatprep.subr.bf16.mxu0 0
  %777 = vmatpush1.bf16.msra.mxu0 0
  %778 = vmatprep.subr.bf16.mxu0 0
  %779 = vmatpush1.bf16.msra.mxu0 0
  %780 = vmatprep.subr.bf16.mxu0 0
  %781 = vmatpush1.bf16.msra.mxu0 0
  %782 = vmatprep.subr.bf16.mxu0 0
  %783 = vmatpush1.bf16.msra.mxu0 0
  %784 = vmatprep.subr.bf16.mxu0 0
  %785 = vmatpush1.bf16.msra.mxu0 0
  %786 = vmatprep.subr.bf16.mxu0 0
  %787 = vmatpush1.bf16.msra.mxu0 0
  %788 = vmatprep.subr.bf16.mxu0 0
  %789 = vmatpush1.bf16.msra.mxu0 0
  %790 = vmatprep.subr.bf16.mxu0 0
  %791 = vmatpush1.bf16.msra.mxu0 0
  %792 = vmatprep.subr.bf16.mxu0 0
  %793 = vmatpush1.bf16.msra.mxu0 0
  %794 = vmatprep.subr.bf16.mxu0 0
  %795 = vmatpush1.bf16.msra.mxu0 0
  %796 = vmatprep.subr.bf16.mxu0 0
  %797 = vmatpush1.bf16.msra.mxu0 0
  %798 = vmatprep.subr.bf16.mxu0 0
  %799 = vmatpush1.bf16.msra.mxu0 0
  %800 = vmatprep.mubr.bf16.mxu0 0
  %801 = vmatmul.mubr.bf16.gmra.mrb[0].mxu0 %v766
  %v802 = vpop.f32.mrb[0].mxu0
  %v803 = vadd.f32 0.0, %v802
  %v804 = vpop.f32.mrb[0].mxu0
  %v805 = vpop.f32.mrb[0].mxu0
  %v806 = vpop.f32.mrb[0].mxu0
  %807 = vdwg.mxu0
  %v808 = vadd.f32 %v756, %v803
  %v809 = vmul.f32 %v808, %v41
  %v810 = vtanh.pop %v809
  %v811 = vmul.f32 %v41, %v810
  %v812 = vadd.f32 %v811, %v42
  %v813 = vmul.f32 %v812, %v642
  %815 = vrot.lane.b32.xlu0 %v812, 64
  %v816 = vpop.permute.xlu0 %815
  %v818 = vmul.f32 %v812, %v816
  %820 = vrot.lane.b32.xlu0 %v818, 32
  %v821 = vpop.permute.xlu0 %820
  %v823 = vadd.f32 %v813, %v821
  %v824 = vtanh.pop %v823
  %826 = vrot.lane.b32.xlu0 %v824, 64
  %v827 = vpop.permute.xlu0 %826
  %v829 = vmul.f32 %v812, %v827
  %s830 = scalar_lea.vmem [#allocation2], 16
  %v831 = vld [vmem:[%s830] sm:$0xf]
  %v832 = vunpack.c.l.bf16 %v831
  %v833 = vpack.c.bf16 %v720, %v720
  %835 = vrot.lane.b32.xlu0 %v833, 32
  %v836 = vpop.permute.xlu0 %835
  %v838 = vsel %vm78, %v836, 0
  %840 = vmatprep.subr.bf16.mxu0 0
  %841 = vmatpush1.bf16.msra.mxu0 %v195
  %842 = vmatprep.subr.bf16.mxu0 0
  %843 = vmatpush1.bf16.msra.mxu0 %v196
  %844 = vmatprep.subr.bf16.mxu0 0
  %845 = vmatpush1.bf16.msra.mxu0 0
  %846 = vmatprep.subr.bf16.mxu0 0
  %847 = vmatpush1.bf16.msra.mxu0 0
  %848 = vmatprep.subr.bf16.mxu0 0
  %849 = vmatpush1.bf16.msra.mxu0 0
  %850 = vmatprep.subr.bf16.mxu0 0
  %851 = vmatpush1.bf16.msra.mxu0 0
  %852 = vmatprep.subr.bf16.mxu0 0
  %853 = vmatpush1.bf16.msra.mxu0 0
  %854 = vmatprep.subr.bf16.mxu0 0
  %855 = vmatpush1.bf16.msra.mxu0 0
  %856 = vmatprep.subr.bf16.mxu0 0
  %857 = vmatpush1.bf16.msra.mxu0 0
  %858 = vmatprep.subr.bf16.mxu0 0
  %859 = vmatpush1.bf16.msra.mxu0 0
  %860 = vmatprep.subr.bf16.mxu0 0
  %861 = vmatpush1.bf16.msra.mxu0 0
  %862 = vmatprep.subr.bf16.mxu0 0
  %863 = vmatpush1.bf16.msra.mxu0 0
  %864 = vmatprep.subr.bf16.mxu0 0
  %865 = vmatpush1.bf16.msra.mxu0 0
  %866 = vmatprep.subr.bf16.mxu0 0
  %867 = vmatpush1.bf16.msra.mxu0 0
  %868 = vmatprep.subr.bf16.mxu0 0
  %869 = vmatpush1.bf16.msra.mxu0 0
  %870 = vmatprep.subr.bf16.mxu0 0
  %871 = vmatpush1.bf16.msra.mxu0 0
  %872 = vmatprep.mubr.bf16.mxu0 0
  %873 = vmatmul.mubr.bf16.gmra.mrb[0].mxu0 %v838
  %v874 = vpop.f32.mrb[0].mxu0
  %v875 = vadd.f32 0.0, %v874
  %v876 = vpop.f32.mrb[0].mxu0
  %v877 = vpop.f32.mrb[0].mxu0
  %v878 = vpop.f32.mrb[0].mxu0
  %879 = vdwg.mxu0
  %v880 = vadd.f32 %v832, %v875
  %v881 = vmul.f32 %v880, %v41
  %v882 = vtanh.pop %v881
  %v883 = vmul.f32 %v41, %v882
  %v884 = vadd.f32 %v883, %v42
  %v885 = vmul.f32 %v884, %v714
  %887 = vrot.lane.b32.xlu0 %v884, 64
  %v888 = vpop.permute.xlu0 %887
  %v890 = vmul.f32 %v884, %v888
  %892 = vrot.lane.b32.xlu0 %v890, 32
  %v893 = vpop.permute.xlu0 %892
  %v895 = vadd.f32 %v885, %v893
  %v896 = vtanh.pop %v895
  %898 = vrot.lane.b32.xlu0 %v896, 64
  %v899 = vpop.permute.xlu0 %898
  %v901 = vmul.f32 %v884, %v899
  %902 = vmatprep.subr.bf16.mxu0 0
  %903 = vmatpush1.bf16.msra.mxu0 %v350
  %904 = vmatprep.subr.bf16.mxu0 0
  %905 = vmatpush1.bf16.msra.mxu0 %v351
  %906 = vmatprep.subr.bf16.mxu0 0
  %907 = vmatpush1.bf16.msra.mxu0 0
  %908 = vmatprep.subr.bf16.mxu0 0
  %909 = vmatpush1.bf16.msra.mxu0 0
  %910 = vmatprep.subr.bf16.mxu0 0
  %911 = vmatpush1.bf16.msra.mxu0 0
  %912 = vmatprep.subr.bf16.mxu0 0
  %913 = vmatpush1.bf16.msra.mxu0 0
  %914 = vmatprep.subr.bf16.mxu0 0
  %915 = vmatpush1.bf16.msra.mxu0 0
  %916 = vmatprep.subr.bf16.mxu0 0
  %917 = vmatpush1.bf16.msra.mxu0 0
  %918 = vmatprep.subr.bf16.mxu0 0
  %919 = vmatpush1.bf16.msra.mxu0 0
  %920 = vmatprep.subr.bf16.mxu0 0
  %921 = vmatpush1.bf16.msra.mxu0 0
  %922 = vmatprep.subr.bf16.mxu0 0
  %923 = vmatpush1.bf16.msra.mxu0 0
  %924 = vmatprep.subr.bf16.mxu0 0
  %925 = vmatpush1.bf16.msra.mxu0 0
  %926 = vmatprep.subr.bf16.mxu0 0
  %927 = vmatpush1.bf16.msra.mxu0 0
  %928 = vmatprep.subr.bf16.mxu0 0
  %929 = vmatpush1.bf16.msra.mxu0 0
  %930 = vmatprep.subr.bf16.mxu0 0
  %931 = vmatpush1.bf16.msra.mxu0 0
  %932 = vmatprep.subr.bf16.mxu0 0
  %933 = vmatpush1.bf16.msra.mxu0 0
  %934 = vmatprep.mubr.bf16.mxu0 0
  %935 = vmatmul.mubr.bf16.gmra.mrb[0].mxu0 %v838
  %v936 = vpop.f32.mrb[0].mxu0
  %v937 = vadd.f32 %v340, %v936
  %v938 = vpop.f32.mrb[0].mxu0
  %v939 = vpop.f32.mrb[0].mxu0
  %v940 = vpop.f32.mrb[0].mxu0
  %941 = vdwg.mxu0
  %v942 = vpack.c.bf16 %v829, %v829
  %944 = vrot.lane.b32.xlu0 %v942, 32
  %v945 = vpop.permute.xlu0 %944
  %v947 = vsel %vm78, %v945, 0
  %949 = vmatprep.subr.bf16.mxu0 0
  %950 = vmatpush1.bf16.msra.mxu0 %v402
  %951 = vmatprep.subr.bf16.mxu0 0
  %952 = vmatpush1.bf16.msra.mxu0 %v403
  %953 = vmatprep.subr.bf16.mxu0 0
  %954 = vmatpush1.bf16.msra.mxu0 0
  %955 = vmatprep.subr.bf16.mxu0 0
  %956 = vmatpush1.bf16.msra.mxu0 0
  %957 = vmatprep.subr.bf16.mxu0 0
  %958 = vmatpush1.bf16.msra.mxu0 0
  %959 = vmatprep.subr.bf16.mxu0 0
  %960 = vmatpush1.bf16.msra.mxu0 0
  %961 = vmatprep.subr.bf16.mxu0 0
  %962 = vmatpush1.bf16.msra.mxu0 0
  %963 = vmatprep.subr.bf16.mxu0 0
  %964 = vmatpush1.bf16.msra.mxu0 0
  %965 = vmatprep.subr.bf16.mxu0 0
  %966 = vmatpush1.bf16.msra.mxu0 0
  %967 = vmatprep.subr.bf16.mxu0 0
  %968 = vmatpush1.bf16.msra.mxu0 0
  %969 = vmatprep.subr.bf16.mxu0 0
  %970 = vmatpush1.bf16.msra.mxu0 0
  %971 = vmatprep.subr.bf16.mxu0 0
  %972 = vmatpush1.bf16.msra.mxu0 0
  %973 = vmatprep.subr.bf16.mxu0 0
  %974 = vmatpush1.bf16.msra.mxu0 0
  %975 = vmatprep.subr.bf16.mxu0 0
  %976 = vmatpush1.bf16.msra.mxu0 0
  %977 = vmatprep.subr.bf16.mxu0 0
  %978 = vmatpush1.bf16.msra.mxu0 0
  %979 = vmatprep.subr.bf16.mxu0 0
  %980 = vmatpush1.bf16.msra.mxu0 0
  %981 = vmatprep.mubr.bf16.mxu0 0
  %982 = vmatmul.mubr.bf16.gmra.mrb[0].mxu0 %v947
  %v983 = vpop.f32.mrb[0].mxu0
  %v984 = vadd.f32 0.0, %v983
  %v985 = vpop.f32.mrb[0].mxu0
  %v986 = vpop.f32.mrb[0].mxu0
  %v987 = vpop.f32.mrb[0].mxu0
  %988 = vdwg.mxu0
  %v989 = vadd.f32 %v937, %v984
  %v990 = vmul.f32 %v989, %v41
  %v991 = vtanh.pop %v990
  %v992 = vmul.f32 %v41, %v991
  %v993 = vadd.f32 %v992, %v42
  %v994 = vmul.f32 %v993, %v823
  %996 = vrot.lane.b32.xlu0 %v993, 64
  %v997 = vpop.permute.xlu0 %996
  %v999 = vmul.f32 %v993, %v997
  %1001 = vrot.lane.b32.xlu0 %v999, 32
  %v1002 = vpop.permute.xlu0 %1001
  %v1004 = vadd.f32 %v994, %v1002
  %v1005 = vtanh.pop %v1004
  %1007 = vrot.lane.b32.xlu0 %v1005, 64
  %v1008 = vpop.permute.xlu0 %1007
  %v1010 = vmul.f32 %v993, %v1008
  %s1011 = scalar_lea.vmem [#allocation2], 20
  %v1012 = vld [vmem:[%s1011] sm:$0xf]
  %v1013 = vunpack.c.l.bf16 %v1012
  %v1014 = vpack.c.bf16 %v901, %v901
  %1016 = vrot.lane.b32.xlu0 %v1014, 32
  %v1017 = vpop.permute.xlu0 %1016
  %v1019 = vsel %vm78, %v1017, 0
  %1021 = vmatprep.subr.bf16.mxu0 0
  %1022 = vmatpush1.bf16.msra.mxu0 %v195
  %1023 = vmatprep.subr.bf16.mxu0 0
  %1024 = vmatpush1.bf16.msra.mxu0 %v196
  %1025 = vmatprep.subr.bf16.mxu0 0
  %1026 = vmatpush1.bf16.msra.mxu0 0
  %1027 = vmatprep.subr.bf16.mxu0 0
  %1028 = vmatpush1.bf16.msra.mxu0 0
  %1029 = vmatprep.subr.bf16.mxu0 0
  %1030 = vmatpush1.bf16.msra.mxu0 0
  %1031 = vmatprep.subr.bf16.mxu0 0
  %1032 = vmatpush1.bf16.msra.mxu0 0
  %1033 = vmatprep.subr.bf16.mxu0 0
  %1034 = vmatpush1.bf16.msra.mxu0 0
  %1035 = vmatprep.subr.bf16.mxu0 0
  %1036 = vmatpush1.bf16.msra.mxu0 0
  %1037 = vmatprep.subr.bf16.mxu0 0
  %1038 = vmatpush1.bf16.msra.mxu0 0
  %1039 = vmatprep.subr.bf16.mxu0 0
  %1040 = vmatpush1.bf16.msra.mxu0 0
  %1041 = vmatprep.subr.bf16.mxu0 0
  %1042 = vmatpush1.bf16.msra.mxu0 0
  %1043 = vmatprep.subr.bf16.mxu0 0
  %1044 = vmatpush1.bf16.msra.mxu0 0
  %1045 = vmatprep.subr.bf16.mxu0 0
  %1046 = vmatpush1.bf16.msra.mxu0 0
  %1047 = vmatprep.subr.bf16.mxu0 0
  %1048 = vmatpush1.bf16.msra.mxu0 0
  %1049 = vmatprep.subr.bf16.mxu0 0
  %1050 = vmatpush1.bf16.msra.mxu0 0
  %1051 = vmatprep.subr.bf16.mxu0 0
  %1052 = vmatpush1.bf16.msra.mxu0 0
  %1053 = vmatprep.mubr.bf16.mxu0 0
  %1054 = vmatmul.mubr.bf16.gmra.mrb[0].mxu0 %v1019
  %v1055 = vpop.f32.mrb[0].mxu0
  %v1056 = vadd.f32 0.0, %v1055
  %v1057 = vpop.f32.mrb[0].mxu0
  %v1058 = vpop.f32.mrb[0].mxu0
  %v1059 = vpop.f32.mrb[0].mxu0
  %1060 = vdwg.mxu0
  %v1061 = vadd.f32 %v1013, %v1056
  %v1062 = vmul.f32 %v1061, %v41
  %v1063 = vtanh.pop %v1062
  %v1064 = vmul.f32 %v41, %v1063
  %v1065 = vadd.f32 %v1064, %v42
  %v1066 = vmul.f32 %v1065, %v895
  %1068 = vrot.lane.b32.xlu0 %v1065, 64
  %v1069 = vpop.permute.xlu0 %1068
  %v1071 = vmul.f32 %v1065, %v1069
  %1073 = vrot.lane.b32.xlu0 %v1071, 32
  %v1074 = vpop.permute.xlu0 %1073
  %v1076 = vadd.f32 %v1066, %v1074
  %v1077 = vtanh.pop %v1076
  %1079 = vrot.lane.b32.xlu0 %v1077, 64
  %v1080 = vpop.permute.xlu0 %1079
  %v1082 = vmul.f32 %v1065, %v1080
  %1083 = vmatprep.subr.bf16.mxu0 0
  %1084 = vmatpush1.bf16.msra.mxu0 %v350
  %1085 = vmatprep.subr.bf16.mxu0 0
  %1086 = vmatpush1.bf16.msra.mxu0 %v351
  %1087 = vmatprep.subr.bf16.mxu0 0
  %1088 = vmatpush1.bf16.msra.mxu0 0
  %1089 = vmatprep.subr.bf16.mxu0 0
  %1090 = vmatpush1.bf16.msra.mxu0 0
  %1091 = vmatprep.subr.bf16.mxu0 0
  %1092 = vmatpush1.bf16.msra.mxu0 0
  %1093 = vmatprep.subr.bf16.mxu0 0
  %1094 = vmatpush1.bf16.msra.mxu0 0
  %1095 = vmatprep.subr.bf16.mxu0 0
  %1096 = vmatpush1.bf16.msra.mxu0 0
  %1097 = vmatprep.subr.bf16.mxu0 0
  %1098 = vmatpush1.bf16.msra.mxu0 0
  %1099 = vmatprep.subr.bf16.mxu0 0
  %1100 = vmatpush1.bf16.msra.mxu0 0
  %1101 = vmatprep.subr.bf16.mxu0 0
  %1102 = vmatpush1.bf16.msra.mxu0 0
  %1103 = vmatprep.subr.bf16.mxu0 0
  %1104 = vmatpush1.bf16.msra.mxu0 0
  %1105 = vmatprep.subr.bf16.mxu0 0
  %1106 = vmatpush1.bf16.msra.mxu0 0
  %1107 = vmatprep.subr.bf16.mxu0 0
  %1108 = vmatpush1.bf16.msra.mxu0 0
  %1109 = vmatprep.subr.bf16.mxu0 0
  %1110 = vmatpush1.bf16.msra.mxu0 0
  %1111 = vmatprep.subr.bf16.mxu0 0
  %1112 = vmatpush1.bf16.msra.mxu0 0
  %1113 = vmatprep.subr.bf16.mxu0 0
  %1114 = vmatpush1.bf16.msra.mxu0 0
  %1115 = vmatprep.mubr.bf16.mxu0 0
  %1116 = vmatmul.mubr.bf16.gmra.mrb[0].mxu0 %v1019
  %v1117 = vpop.f32.mrb[0].mxu0
  %v1118 = vadd.f32 %v340, %v1117
  %v1119 = vpop.f32.mrb[0].mxu0
  %v1120 = vpop.f32.mrb[0].mxu0
  %v1121 = vpop.f32.mrb[0].mxu0
  %1122 = vdwg.mxu0
  %v1123 = vpack.c.bf16 %v1010, %v1010
  %1125 = vrot.lane.b32.xlu0 %v1123, 32
  %v1126 = vpop.permute.xlu0 %1125
  %v1128 = vsel %vm78, %v1126, 0
  %1130 = vmatprep.subr.bf16.mxu0 0
  %1131 = vmatpush1.bf16.msra.mxu0 %v402
  %1132 = vmatprep.subr.bf16.mxu0 0
  %1133 = vmatpush1.bf16.msra.mxu0 %v403
  %1134 = vmatprep.subr.bf16.mxu0 0
  %1135 = vmatpush1.bf16.msra.mxu0 0
  %1136 = vmatprep.subr.bf16.mxu0 0
  %1137 = vmatpush1.bf16.msra.mxu0 0
  %1138 = vmatprep.subr.bf16.mxu0 0
  %1139 = vmatpush1.bf16.msra.mxu0 0
  %1140 = vmatprep.subr.bf16.mxu0 0
  %1141 = vmatpush1.bf16.msra.mxu0 0
  %1142 = vmatprep.subr.bf16.mxu0 0
  %1143 = vmatpush1.bf16.msra.mxu0 0
  %1144 = vmatprep.subr.bf16.mxu0 0
  %1145 = vmatpush1.bf16.msra.mxu0 0
  %1146 = vmatprep.subr.bf16.mxu0 0
  %1147 = vmatpush1.bf16.msra.mxu0 0
  %1148 = vmatprep.subr.bf16.mxu0 0
  %1149 = vmatpush1.bf16.msra.mxu0 0
  %1150 = vmatprep.subr.bf16.mxu0 0
  %1151 = vmatpush1.bf16.msra.mxu0 0
  %1152 = vmatprep.subr.bf16.mxu0 0
  %1153 = vmatpush1.bf16.msra.mxu0 0
  %1154 = vmatprep.subr.bf16.mxu0 0
  %1155 = vmatpush1.bf16.msra.mxu0 0
  %1156 = vmatprep.subr.bf16.mxu0 0
  %1157 = vmatpush1.bf16.msra.mxu0 0
  %1158 = vmatprep.subr.bf16.mxu0 0
  %1159 = vmatpush1.bf16.msra.mxu0 0
  %1160 = vmatprep.subr.bf16.mxu0 0
  %1161 = vmatpush1.bf16.msra.mxu0 0
  %1162 = vmatprep.mubr.bf16.mxu0 0
  %1163 = vmatmul.mubr.bf16.gmra.mrb[0].mxu0 %v1128
  %v1164 = vpop.f32.mrb[0].mxu0
  %v1165 = vadd.f32 0.0, %v1164
  %v1166 = vpop.f32.mrb[0].mxu0
  %v1167 = vpop.f32.mrb[0].mxu0
  %v1168 = vpop.f32.mrb[0].mxu0
  %1169 = vdwg.mxu0
  %v1170 = vadd.f32 %v1118, %v1165
  %v1171 = vmul.f32 %v1170, %v41
  %v1172 = vtanh.pop %v1171
  %v1173 = vmul.f32 %v41, %v1172
  %v1174 = vadd.f32 %v1173, %v42
  %v1175 = vmul.f32 %v1174, %v1004
  %1177 = vrot.lane.b32.xlu0 %v1174, 64
  %v1178 = vpop.permute.xlu0 %1177
  %v1180 = vmul.f32 %v1174, %v1178
  %1182 = vrot.lane.b32.xlu0 %v1180, 32
  %v1183 = vpop.permute.xlu0 %1182
  %v1185 = vadd.f32 %v1175, %v1183
  %v1186 = vtanh.pop %v1185
  %1188 = vrot.lane.b32.xlu0 %v1186, 64
  %v1189 = vpop.permute.xlu0 %1188
  %v1191 = vmul.f32 %v1174, %v1189
  %s1192 = scalar_lea.vmem [#allocation2], 24
  %v1193 = vld [vmem:[%s1192] sm:$0xf]
  %v1194 = vunpack.c.l.bf16 %v1193
  %v1195 = vpack.c.bf16 %v1082, %v1082
  %1197 = vrot.lane.b32.xlu0 %v1195, 32
  %v1198 = vpop.permute.xlu0 %1197
  %v1200 = vsel %vm78, %v1198, 0
  %1202 = vmatprep.subr.bf16.mxu0 0
  %1203 = vmatpush1.bf16.msra.mxu0 %v195
  %1204 = vmatprep.subr.bf16.mxu0 0
  %1205 = vmatpush1.bf16.msra.mxu0 %v196
  %1206 = vmatprep.subr.bf16.mxu0 0
  %1207 = vmatpush1.bf16.msra.mxu0 0
  %1208 = vmatprep.subr.bf16.mxu0 0
  %1209 = vmatpush1.bf16.msra.mxu0 0
  %1210 = vmatprep.subr.bf16.mxu0 0
  %1211 = vmatpush1.bf16.msra.mxu0 0
  %1212 = vmatprep.subr.bf16.mxu0 0
  %1213 = vmatpush1.bf16.msra.mxu0 0
  %1214 = vmatprep.subr.bf16.mxu0 0
  %1215 = vmatpush1.bf16.msra.mxu0 0
  %1216 = vmatprep.subr.bf16.mxu0 0
  %1217 = vmatpush1.bf16.msra.mxu0 0
  %1218 = vmatprep.subr.bf16.mxu0 0
  %1219 = vmatpush1.bf16.msra.mxu0 0
  %1220 = vmatprep.subr.bf16.mxu0 0
  %1221 = vmatpush1.bf16.msra.mxu0 0
  %1222 = vmatprep.subr.bf16.mxu0 0
  %1223 = vmatpush1.bf16.msra.mxu0 0
  %1224 = vmatprep.subr.bf16.mxu0 0
  %1225 = vmatpush1.bf16.msra.mxu0 0
  %1226 = vmatprep.subr.bf16.mxu0 0
  %1227 = vmatpush1.bf16.msra.mxu0 0
  %1228 = vmatprep.subr.bf16.mxu0 0
  %1229 = vmatpush1.bf16.msra.mxu0 0
  %1230 = vmatprep.subr.bf16.mxu0 0
  %1231 = vmatpush1.bf16.msra.mxu0 0
  %1232 = vmatprep.subr.bf16.mxu0 0
  %1233 = vmatpush1.bf16.msra.mxu0 0
  %1234 = vmatprep.mubr.bf16.mxu0 0
  %1235 = vmatmul.mubr.bf16.gmra.mrb[0].mxu0 %v1200
  %v1236 = vpop.f32.mrb[0].mxu0
  %v1237 = vadd.f32 0.0, %v1236
  %v1238 = vpop.f32.mrb[0].mxu0
  %v1239 = vpop.f32.mrb[0].mxu0
  %v1240 = vpop.f32.mrb[0].mxu0
  %1241 = vdwg.mxu0
  %v1242 = vadd.f32 %v1194, %v1237
  %v1243 = vmul.f32 %v1242, %v41
  %v1244 = vtanh.pop %v1243
  %v1245 = vmul.f32 %v41, %v1244
  %v1246 = vadd.f32 %v1245, %v42
  %v1247 = vmul.f32 %v1246, %v1076
  %1249 = vrot.lane.b32.xlu0 %v1246, 64
  %v1250 = vpop.permute.xlu0 %1249
  %v1252 = vmul.f32 %v1246, %v1250
  %1254 = vrot.lane.b32.xlu0 %v1252, 32
  %v1255 = vpop.permute.xlu0 %1254
  %v1257 = vadd.f32 %v1247, %v1255
  %v1258 = vtanh.pop %v1257
  %1260 = vrot.lane.b32.xlu0 %v1258, 64
  %v1261 = vpop.permute.xlu0 %1260
  %v1263 = vmul.f32 %v1246, %v1261
  %1264 = vmatprep.subr.bf16.mxu0 0
  %1265 = vmatpush1.bf16.msra.mxu0 %v350
  %1266 = vmatprep.subr.bf16.mxu0 0
  %1267 = vmatpush1.bf16.msra.mxu0 %v351
  %1268 = vmatprep.subr.bf16.mxu0 0
  %1269 = vmatpush1.bf16.msra.mxu0 0
  %1270 = vmatprep.subr.bf16.mxu0 0
  %1271 = vmatpush1.bf16.msra.mxu0 0
  %1272 = vmatprep.subr.bf16.mxu0 0
  %1273 = vmatpush1.bf16.msra.mxu0 0
  %1274 = vmatprep.subr.bf16.mxu0 0
  %1275 = vmatpush1.bf16.msra.mxu0 0
  %1276 = vmatprep.subr.bf16.mxu0 0
  %1277 = vmatpush1.bf16.msra.mxu0 0
  %1278 = vmatprep.subr.bf16.mxu0 0
  %1279 = vmatpush1.bf16.msra.mxu0 0
  %1280 = vmatprep.subr.bf16.mxu0 0
  %1281 = vmatpush1.bf16.msra.mxu0 0
  %1282 = vmatprep.subr.bf16.mxu0 0
  %1283 = vmatpush1.bf16.msra.mxu0 0
  %1284 = vmatprep.subr.bf16.mxu0 0
  %1285 = vmatpush1.bf16.msra.mxu0 0
  %1286 = vmatprep.subr.bf16.mxu0 0
  %1287 = vmatpush1.bf16.msra.mxu0 0
  %1288 = vmatprep.subr.bf16.mxu0 0
  %1289 = vmatpush1.bf16.msra.mxu0 0
  %1290 = vmatprep.subr.bf16.mxu0 0
  %1291 = vmatpush1.bf16.msra.mxu0 0
  %1292 = vmatprep.subr.bf16.mxu0 0
  %1293 = vmatpush1.bf16.msra.mxu0 0
  %1294 = vmatprep.subr.bf16.mxu0 0
  %1295 = vmatpush1.bf16.msra.mxu0 0
  %1296 = vmatprep.mubr.bf16.mxu0 0
  %1297 = vmatmul.mubr.bf16.gmra.mrb[0].mxu0 %v1200
  %v1298 = vpop.f32.mrb[0].mxu0
  %v1299 = vadd.f32 %v340, %v1298
  %v1300 = vpop.f32.mrb[0].mxu0
  %v1301 = vpop.f32.mrb[0].mxu0
  %v1302 = vpop.f32.mrb[0].mxu0
  %1303 = vdwg.mxu0
  %v1304 = vpack.c.bf16 %v1191, %v1191
  %1306 = vrot.lane.b32.xlu0 %v1304, 32
  %v1307 = vpop.permute.xlu0 %1306
  %v1309 = vsel %vm78, %v1307, 0
  %1311 = vmatprep.subr.bf16.mxu0 0
  %1312 = vmatpush1.bf16.msra.mxu0 %v402
  %1313 = vmatprep.subr.bf16.mxu0 0
  %1314 = vmatpush1.bf16.msra.mxu0 %v403
  %1315 = vmatprep.subr.bf16.mxu0 0
  %1316 = vmatpush1.bf16.msra.mxu0 0
  %1317 = vmatprep.subr.bf16.mxu0 0
  %1318 = vmatpush1.bf16.msra.mxu0 0
  %1319 = vmatprep.subr.bf16.mxu0 0
  %1320 = vmatpush1.bf16.msra.mxu0 0
  %1321 = vmatprep.subr.bf16.mxu0 0
  %1322 = vmatpush1.bf16.msra.mxu0 0
  %1323 = vmatprep.subr.bf16.mxu0 0
  %1324 = vmatpush1.bf16.msra.mxu0 0
  %1325 = vmatprep.subr.bf16.mxu0 0
  %1326 = vmatpush1.bf16.msra.mxu0 0
  %1327 = vmatprep.subr.bf16.mxu0 0
  %1328 = vmatpush1.bf16.msra.mxu0 0
  %1329 = vmatprep.subr.bf16.mxu0 0
  %1330 = vmatpush1.bf16.msra.mxu0 0
  %1331 = vmatprep.subr.bf16.mxu0 0
  %1332 = vmatpush1.bf16.msra.mxu0 0
  %1333 = vmatprep.subr.bf16.mxu0 0
  %1334 = vmatpush1.bf16.msra.mxu0 0
  %1335 = vmatprep.subr.bf16.mxu0 0
  %1336 = vmatpush1.bf16.msra.mxu0 0
  %1337 = vmatprep.subr.bf16.mxu0 0
  %1338 = vmatpush1.bf16.msra.mxu0 0
  %1339 = vmatprep.subr.bf16.mxu0 0
  %1340 = vmatpush1.bf16.msra.mxu0 0
  %1341 = vmatprep.subr.bf16.mxu0 0
  %1342 = vmatpush1.bf16.msra.mxu0 0
  %1343 = vmatprep.mubr.bf16.mxu0 0
  %1344 = vmatmul.mubr.bf16.gmra.mrb[0].mxu0 %v1309
  %v1345 = vpop.f32.mrb[0].mxu0
  %v1346 = vadd.f32 0.0, %v1345
  %v1347 = vpop.f32.mrb[0].mxu0
  %v1348 = vpop.f32.mrb[0].mxu0
  %v1349 = vpop.f32.mrb[0].mxu0
  %1350 = vdwg.mxu0
  %v1351 = vadd.f32 %v1299, %v1346
  %v1352 = vmul.f32 %v1351, %v41
  %v1353 = vtanh.pop %v1352
  %v1354 = vmul.f32 %v41, %v1353
  %v1355 = vadd.f32 %v1354, %v42
  %v1356 = vmul.f32 %v1355, %v1185
  %1358 = vrot.lane.b32.xlu0 %v1355, 64
  %v1359 = vpop.permute.xlu0 %1358
  %v1361 = vmul.f32 %v1355, %v1359
  %1363 = vrot.lane.b32.xlu0 %v1361, 32
  %v1364 = vpop.permute.xlu0 %1363
  %v1366 = vadd.f32 %v1356, %v1364
  %v1367 = vtanh.pop %v1366
  %1369 = vrot.lane.b32.xlu0 %v1367, 64
  %v1370 = vpop.permute.xlu0 %1369
  %v1372 = vmul.f32 %v1355, %v1370
  %s1373 = scalar_lea.vmem [#allocation2], 28
  %v1374 = vld [vmem:[%s1373] sm:$0xf]
  %v1375 = vunpack.c.l.bf16 %v1374
  %v1376 = vpack.c.bf16 %v1263, %v1263
  %1378 = vrot.lane.b32.xlu0 %v1376, 32
  %v1379 = vpop.permute.xlu0 %1378
  %v1381 = vsel %vm78, %v1379, 0
  %1383 = vmatprep.subr.bf16.mxu0 0
  %1384 = vmatpush1.bf16.msra.mxu0 %v195
  %1385 = vmatprep.subr.bf16.mxu0 0
  %1386 = vmatpush1.bf16.msra.mxu0 %v196
  %1387 = vmatprep.subr.bf16.mxu0 0
  %1388 = vmatpush1.bf16.msra.mxu0 0
  %1389 = vmatprep.subr.bf16.mxu0 0
  %1390 = vmatpush1.bf16.msra.mxu0 0
  %1391 = vmatprep.subr.bf16.mxu0 0
  %1392 = vmatpush1.bf16.msra.mxu0 0
  %1393 = vmatprep.subr.bf16.mxu0 0
  %1394 = vmatpush1.bf16.msra.mxu0 0
  %1395 = vmatprep.subr.bf16.mxu0 0
  %1396 = vmatpush1.bf16.msra.mxu0 0
  %1397 = vmatprep.subr.bf16.mxu0 0
  %1398 = vmatpush1.bf16.msra.mxu0 0
  %1399 = vmatprep.subr.bf16.mxu0 0
  %1400 = vmatpush1.bf16.msra.mxu0 0
  %1401 = vmatprep.subr.bf16.mxu0 0
  %1402 = vmatpush1.bf16.msra.mxu0 0
  %1403 = vmatprep.subr.bf16.mxu0 0
  %1404 = vmatpush1.bf16.msra.mxu0 0
  %1405 = vmatprep.subr.bf16.mxu0 0
  %1406 = vmatpush1.bf16.msra.mxu0 0
  %1407 = vmatprep.subr.bf16.mxu0 0
  %1408 = vmatpush1.bf16.msra.mxu0 0
  %1409 = vmatprep.subr.bf16.mxu0 0
  %1410 = vmatpush1.bf16.msra.mxu0 0
  %1411 = vmatprep.subr.bf16.mxu0 0
  %1412 = vmatpush1.bf16.msra.mxu0 0
  %1413 = vmatprep.subr.bf16.mxu0 0
  %1414 = vmatpush1.bf16.msra.mxu0 0
  %1415 = vmatprep.mubr.bf16.mxu0 0
  %1416 = vmatmul.mubr.bf16.gmra.mrb[0].mxu0 %v1381
  %v1417 = vpop.f32.mrb[0].mxu0
  %v1418 = vadd.f32 0.0, %v1417
  %v1419 = vpop.f32.mrb[0].mxu0
  %v1420 = vpop.f32.mrb[0].mxu0
  %v1421 = vpop.f32.mrb[0].mxu0
  %1422 = vdwg.mxu0
  %v1423 = vadd.f32 %v1375, %v1418
  %v1424 = vmul.f32 %v1423, %v41
  %v1425 = vtanh.pop %v1424
  %v1426 = vmul.f32 %v41, %v1425
  %v1427 = vadd.f32 %v1426, %v42
  %v1428 = vmul.f32 %v1427, %v1257
  %1430 = vrot.lane.b32.xlu0 %v1427, 64
  %v1431 = vpop.permute.xlu0 %1430
  %v1433 = vmul.f32 %v1427, %v1431
  %1435 = vrot.lane.b32.xlu0 %v1433, 32
  %v1436 = vpop.permute.xlu0 %1435
  %v1438 = vadd.f32 %v1428, %v1436
  %v1439 = vtanh.pop %v1438
  %1441 = vrot.lane.b32.xlu0 %v1439, 64
  %v1442 = vpop.permute.xlu0 %1441
  %v1444 = vmul.f32 %v1427, %v1442
  %1445 = vmatprep.subr.bf16.mxu0 0
  %1446 = vmatpush1.bf16.msra.mxu0 %v350
  %1447 = vmatprep.subr.bf16.mxu0 0
  %1448 = vmatpush1.bf16.msra.mxu0 %v351
  %1449 = vmatprep.subr.bf16.mxu0 0
  %1450 = vmatpush1.bf16.msra.mxu0 0
  %1451 = vmatprep.subr.bf16.mxu0 0
  %1452 = vmatpush1.bf16.msra.mxu0 0
  %1453 = vmatprep.subr.bf16.mxu0 0
  %1454 = vmatpush1.bf16.msra.mxu0 0
  %1455 = vmatprep.subr.bf16.mxu0 0
  %1456 = vmatpush1.bf16.msra.mxu0 0
  %1457 = vmatprep.subr.bf16.mxu0 0
  %1458 = vmatpush1.bf16.msra.mxu0 0
  %1459 = vmatprep.subr.bf16.mxu0 0
  %1460 = vmatpush1.bf16.msra.mxu0 0
  %1461 = vmatprep.subr.bf16.mxu0 0
  %1462 = vmatpush1.bf16.msra.mxu0 0
  %1463 = vmatprep.subr.bf16.mxu0 0
  %1464 = vmatpush1.bf16.msra.mxu0 0
  %1465 = vmatprep.subr.bf16.mxu0 0
  %1466 = vmatpush1.bf16.msra.mxu0 0
  %1467 = vmatprep.subr.bf16.mxu0 0
  %1468 = vmatpush1.bf16.msra.mxu0 0
  %1469 = vmatprep.subr.bf16.mxu0 0
  %1470 = vmatpush1.bf16.msra.mxu0 0
  %1471 = vmatprep.subr.bf16.mxu0 0
  %1472 = vmatpush1.bf16.msra.mxu0 0
  %1473 = vmatprep.subr.bf16.mxu0 0
  %1474 = vmatpush1.bf16.msra.mxu0 0
  %1475 = vmatprep.subr.bf16.mxu0 0
  %1476 = vmatpush1.bf16.msra.mxu0 0
  %1477 = vmatprep.mubr.bf16.mxu0 0
  %1478 = vmatmul.mubr.bf16.gmra.mrb[0].mxu0 %v1381
  %v1479 = vpop.f32.mrb[0].mxu0
  %v1480 = vadd.f32 %v340, %v1479
  %v1481 = vpop.f32.mrb[0].mxu0
  %v1482 = vpop.f32.mrb[0].mxu0
  %v1483 = vpop.f32.mrb[0].mxu0
  %1484 = vdwg.mxu0
  %v1485 = vpack.c.bf16 %v1372, %v1372
  %1487 = vrot.lane.b32.xlu0 %v1485, 32
  %v1488 = vpop.permute.xlu0 %1487
  %v1490 = vsel %vm78, %v1488, 0
  %1492 = vmatprep.subr.bf16.mxu0 0
  %1493 = vmatpush1.bf16.msra.mxu0 %v402
  %1494 = vmatprep.subr.bf16.mxu0 0
  %1495 = vmatpush1.bf16.msra.mxu0 %v403
  %1496 = vmatprep.subr.bf16.mxu0 0
  %1497 = vmatpush1.bf16.msra.mxu0 0
  %1498 = vmatprep.subr.bf16.mxu0 0
  %1499 = vmatpush1.bf16.msra.mxu0 0
  %1500 = vmatprep.subr.bf16.mxu0 0
  %1501 = vmatpush1.bf16.msra.mxu0 0
  %1502 = vmatprep.subr.bf16.mxu0 0
  %1503 = vmatpush1.bf16.msra.mxu0 0
  %1504 = vmatprep.subr.bf16.mxu0 0
  %1505 = vmatpush1.bf16.msra.mxu0 0
  %1506 = vmatprep.subr.bf16.mxu0 0
  %1507 = vmatpush1.bf16.msra.mxu0 0
  %1508 = vmatprep.subr.bf16.mxu0 0
  %1509 = vmatpush1.bf16.msra.mxu0 0
  %1510 = vmatprep.subr.bf16.mxu0 0
  %1511 = vmatpush1.bf16.msra.mxu0 0
  %1512 = vmatprep.subr.bf16.mxu0 0
  %1513 = vmatpush1.bf16.msra.mxu0 0
  %1514 = vmatprep.subr.bf16.mxu0 0
  %1515 = vmatpush1.bf16.msra.mxu0 0
  %1516 = vmatprep.subr.bf16.mxu0 0
  %1517 = vmatpush1.bf16.msra.mxu0 0
  %1518 = vmatprep.subr.bf16.mxu0 0
  %1519 = vmatpush1.bf16.msra.mxu0 0
  %1520 = vmatprep.subr.bf16.mxu0 0
  %1521 = vmatpush1.bf16.msra.mxu0 0
  %1522 = vmatprep.subr.bf16.mxu0 0
  %1523 = vmatpush1.bf16.msra.mxu0 0
  %1524 = vmatprep.mubr.bf16.mxu0 0
  %1525 = vmatmul.mubr.bf16.gmra.mrb[0].mxu0 %v1490
  %v1526 = vpop.f32.mrb[0].mxu0
  %v1527 = vadd.f32 0.0, %v1526
  %v1528 = vpop.f32.mrb[0].mxu0
  %v1529 = vpop.f32.mrb[0].mxu0
  %v1530 = vpop.f32.mrb[0].mxu0
  %1531 = vdwg.mxu0
  %v1532 = vadd.f32 %v1480, %v1527
  %v1533 = vmul.f32 %v1532, %v41
  %v1534 = vtanh.pop %v1533
  %v1535 = vmul.f32 %v41, %v1534
  %v1536 = vadd.f32 %v1535, %v42
  %v1537 = vmul.f32 %v1536, %v1366
  %1539 = vrot.lane.b32.xlu0 %v1536, 64
  %v1540 = vpop.permute.xlu0 %1539
  %v1542 = vmul.f32 %v1536, %v1540
  %1544 = vrot.lane.b32.xlu0 %v1542, 32
  %v1545 = vpop.permute.xlu0 %1544
  %v1547 = vadd.f32 %v1537, %v1545
  %v1548 = vtanh.pop %v1547
  %1550 = vrot.lane.b32.xlu0 %v1548, 64
  %v1551 = vpop.permute.xlu0 %1550
  %v1553 = vmul.f32 %v1536, %v1551
  %v1554 = vpack.c.bf16 %v1444, %v1444
  %1556 = vrot.lane.b32.xlu0 %v1554, 32
  %v1557 = vpop.permute.xlu0 %1556
  %v1559 = vsel %vm78, %v1557, 0
  %1561 = vmatprep.subr.bf16.mxu0 0
  %1562 = vmatpush1.bf16.msra.mxu0 %v350
  %1563 = vmatprep.subr.bf16.mxu0 0
  %1564 = vmatpush1.bf16.msra.mxu0 %v351
  %1565 = vmatprep.subr.bf16.mxu0 0
  %1566 = vmatpush1.bf16.msra.mxu0 0
  %1567 = vmatprep.subr.bf16.mxu0 0
  %1568 = vmatpush1.bf16.msra.mxu0 0
  %1569 = vmatprep.subr.bf16.mxu0 0
  %1570 = vmatpush1.bf16.msra.mxu0 0
  %1571 = vmatprep.subr.bf16.mxu0 0
  %1572 = vmatpush1.bf16.msra.mxu0 0
  %1573 = vmatprep.subr.bf16.mxu0 0
  %1574 = vmatpush1.bf16.msra.mxu0 0
  %1575 = vmatprep.subr.bf16.mxu0 0
  %1576 = vmatpush1.bf16.msra.mxu0 0
  %1577 = vmatprep.subr.bf16.mxu0 0
  %1578 = vmatpush1.bf16.msra.mxu0 0
  %1579 = vmatprep.subr.bf16.mxu0 0
  %1580 = vmatpush1.bf16.msra.mxu0 0
  %1581 = vmatprep.subr.bf16.mxu0 0
  %1582 = vmatpush1.bf16.msra.mxu0 0
  %1583 = vmatprep.subr.bf16.mxu0 0
  %1584 = vmatpush1.bf16.msra.mxu0 0
  %1585 = vmatprep.subr.bf16.mxu0 0
  %1586 = vmatpush1.bf16.msra.mxu0 0
  %1587 = vmatprep.subr.bf16.mxu0 0
  %1588 = vmatpush1.bf16.msra.mxu0 0
  %1589 = vmatprep.subr.bf16.mxu0 0
  %1590 = vmatpush1.bf16.msra.mxu0 0
  %1591 = vmatprep.subr.bf16.mxu0 0
  %1592 = vmatpush1.bf16.msra.mxu0 0
  %1593 = vmatprep.mubr.bf16.mxu0 0
  %1594 = vmatmul.mubr.bf16.gmra.mrb[0].mxu0 %v1559
  %v1595 = vpop.f32.mrb[0].mxu0
  %v1596 = vadd.f32 %v340, %v1595
  %v1597 = vpop.f32.mrb[0].mxu0
  %v1598 = vpop.f32.mrb[0].mxu0
  %v1599 = vpop.f32.mrb[0].mxu0
  %1600 = vdwg.mxu0
  %v1601 = vpack.c.bf16 %v1553, %v1553
  %1603 = vrot.lane.b32.xlu0 %v1601, 32
  %v1604 = vpop.permute.xlu0 %1603
  %v1606 = vsel %vm78, %v1604, 0
  %1608 = vmatprep.subr.bf16.mxu0 0
  %1609 = vmatpush1.bf16.msra.mxu0 %v402
  %1610 = vmatprep.subr.bf16.mxu0 0
  %1611 = vmatpush1.bf16.msra.mxu0 %v403
  %1612 = vmatprep.subr.bf16.mxu0 0
  %1613 = vmatpush1.bf16.msra.mxu0 0
  %1614 = vmatprep.subr.bf16.mxu0 0
  %1615 = vmatpush1.bf16.msra.mxu0 0
  %1616 = vmatprep.subr.bf16.mxu0 0
  %1617 = vmatpush1.bf16.msra.mxu0 0
  %1618 = vmatprep.subr.bf16.mxu0 0
  %1619 = vmatpush1.bf16.msra.mxu0 0
  %1620 = vmatprep.subr.bf16.mxu0 0
  %1621 = vmatpush1.bf16.msra.mxu0 0
  %1622 = vmatprep.subr.bf16.mxu0 0
  %1623 = vmatpush1.bf16.msra.mxu0 0
  %1624 = vmatprep.subr.bf16.mxu0 0
  %1625 = vmatpush1.bf16.msra.mxu0 0
  %1626 = vmatprep.subr.bf16.mxu0 0
  %1627 = vmatpush1.bf16.msra.mxu0 0
  %1628 = vmatprep.subr.bf16.mxu0 0
  %1629 = vmatpush1.bf16.msra.mxu0 0
  %1630 = vmatprep.subr.bf16.mxu0 0
  %1631 = vmatpush1.bf16.msra.mxu0 0
  %1632 = vmatprep.subr.bf16.mxu0 0
  %1633 = vmatpush1.bf16.msra.mxu0 0
  %1634 = vmatprep.subr.bf16.mxu0 0
  %1635 = vmatpush1.bf16.msra.mxu0 0
  %1636 = vmatprep.subr.bf16.mxu0 0
  %1637 = vmatpush1.bf16.msra.mxu0 0
  %1638 = vmatprep.subr.bf16.mxu0 0
  %1639 = vmatpush1.bf16.msra.mxu0 0
  %1640 = vmatprep.mubr.bf16.mxu0 0
  %1641 = vmatmul.mubr.bf16.gmra.mrb[0].mxu0 %v1606
  %v1642 = vpop.f32.mrb[0].mxu0
  %v1643 = vadd.f32 0.0, %v1642
  %v1644 = vpop.f32.mrb[0].mxu0
  %v1645 = vpop.f32.mrb[0].mxu0
  %v1646 = vpop.f32.mrb[0].mxu0
  %1647 = vdwg.mxu0
  %v1648 = vadd.f32 %v1596, %v1643
  %v1649 = vmul.f32 %v1648, %v41
  %v1650 = vtanh.pop %v1649
  %v1651 = vmul.f32 %v41, %v1650
  %v1652 = vadd.f32 %v1651, %v42
  %v1653 = vmul.f32 %v1652, %v1547
  %1655 = vrot.lane.b32.xlu0 %v1652, 64
  %v1656 = vpop.permute.xlu0 %1655
  %v1658 = vmul.f32 %v1652, %v1656
  %1660 = vrot.lane.b32.xlu0 %v1658, 32
  %v1661 = vpop.permute.xlu0 %1660
  %v1663 = vadd.f32 %v1653, %v1661
  %v1664 = vtanh.pop %v1663
  %1666 = vrot.lane.b32.xlu0 %v1664, 64
  %v1667 = vpop.permute.xlu0 %1666
  %v1669 = vmul.f32 %v1652, %v1667
  %1671 = vrot.lane.b32.xlu0 %v1444, 32
  %v1672 = vpop.permute.xlu0 %1671
  %1674 = vst.msk [vmem:[%s10] sm:$0xff] %vm78, %v1672
  %1676 = vrot.lane.b32.xlu0 %v1438, 96
  %v1677 = vpop.permute.xlu0 %1676
  %1679 = vst.msk [vmem:[%s11] sm:$0xff] %vm78, %v1677
  %1681 = vrot.lane.b32.xlu0 %v1669, 32
  %v1682 = vpop.permute.xlu0 %1681
  %s1684 = scalar_lea.vmem %s10, 8
  %1685 = vst.msk [vmem:[%s1684] sm:$0xff] %vm78, %v1682
  %1687 = vrot.lane.b32.xlu0 %v1663, 96
  %v1688 = vpop.permute.xlu0 %1687
  %s1690 = scalar_lea.vmem %s11, 8
  %1691 = vst.msk [vmem:[%s1690] sm:$0xff] %vm78, %v1688
  %v1692 = vpack.c.bf16 %v1669, %v1669
  %v1693 = vld [vmem:[%s7] sm:$0xf]
  %v1694 = vld [vmem:[%s7 + $0x4] sm:$0xf]
  %v1695 = vld [vmem:[%s7 + $0x8] sm:$0xf]
  %v1696 = vld [vmem:[%s7 + $0xc] sm:$0xf]
  %v1697 = vld [vmem:[%s8] sm:$0x1]
  %v1699 = vlaneseq
  %v1700 = vshrl.u32 %v1699, 7
  %v1701 = vsub.s32 0, %v1700
  %v1702 = vrot.slane %v1697, %v1701
  %1705 = vrot.lane.b32.xlu0 %v1692, 32
  %v1706 = vpop.permute.xlu0 %1705
  %v1711 = vunpack.c.l.b16 %v1693
  %v1712 = vunpack.c.l.b16 %v1694
  %v1713 = vunpack.c.l.b16 %v1695
  %v1714 = vunpack.c.l.b16 %v1696
  %v1715 = vpack.c.b16 %v1712, %v1711
  %v1716 = vpack.c.b16 %v1714, %v1713
  %v1720 = vsel %vm78, %v1706, 0
  %1722 = vmatprep.subr.bf16.mxu0 0
  %1723 = vmatpush1.bf16.msra.mxu0 %v1715
  %1724 = vmatprep.subr.bf16.mxu0 0
  %1725 = vmatpush1.bf16.msra.mxu0 %v1716
  %1726 = vmatprep.subr.bf16.mxu0 0
  %1727 = vmatpush1.bf16.msra.mxu0 0
  %1728 = vmatprep.subr.bf16.mxu0 0
  %1729 = vmatpush1.bf16.msra.mxu0 0
  %1730 = vmatprep.subr.bf16.mxu0 0
  %1731 = vmatpush1.bf16.msra.mxu0 0
  %1732 = vmatprep.subr.bf16.mxu0 0
  %1733 = vmatpush1.bf16.msra.mxu0 0
  %1734 = vmatprep.subr.bf16.mxu0 0
  %1735 = vmatpush1.bf16.msra.mxu0 0
  %1736 = vmatprep.subr.bf16.mxu0 0
  %1737 = vmatpush1.bf16.msra.mxu0 0
  %1738 = vmatprep.subr.bf16.mxu0 0
  %1739 = vmatpush1.bf16.msra.mxu0 0
  %1740 = vmatprep.subr.bf16.mxu0 0
  %1741 = vmatpush1.bf16.msra.mxu0 0
  %1742 = vmatprep.subr.bf16.mxu0 0
  %1743 = vmatpush1.bf16.msra.mxu0 0
  %1744 = vmatprep.subr.bf16.mxu0 0
  %1745 = vmatpush1.bf16.msra.mxu0 0
  %1746 = vmatprep.subr.bf16.mxu0 0
  %1747 = vmatpush1.bf16.msra.mxu0 0
  %1748 = vmatprep.subr.bf16.mxu0 0
  %1749 = vmatpush1.bf16.msra.mxu0 0
  %1750 = vmatprep.subr.bf16.mxu0 0
  %1751 = vmatpush1.bf16.msra.mxu0 0
  %1752 = vmatprep.subr.bf16.mxu0 0
  %1753 = vmatpush1.bf16.msra.mxu0 0
  %1754 = vmatprep.mubr.bf16.mxu0 0
  %1755 = vmatmul.mubr.bf16.gmra.mrb[0].mxu0 %v1720
  %v1756 = vpop.f32.mrb[0].mxu0
  %v1757 = vadd.f32 %v1702, %v1756
  %v1758 = vpop.f32.mrb[0].mxu0
  %v1759 = vpop.f32.mrb[0].mxu0
  %v1760 = vpop.f32.mrb[0].mxu0
  %1761 = vdwg.mxu0
  %v1762 = vxor.u32 %v1757, 2147483648
  %v1763 = vmul.f32 %v1762, 1.442695
  %v1764 = vpow.pop %v1763
  %v1765 = vadd.f32 %v1764, 1.0
  %v1766 = vrcp.pop %v1765
  %v1767 = vmul.f32 1.0, %v1766
  %1768 = vst [vmem:[%s9] sm:$0xff] %v1767
  // Predicated region
  $region38: #{sentiment_lstm_forward.1} parent=0 // pred_check
    _
  $region39: #{sentiment_lstm_forward.1} parent=0 // pred_check_branch
    %1770 = sbr.rel (0) target = $region41
  $region40: #{sentiment_lstm_forward.1} parent=0 // pred_region
    _
  $region41: #{sentiment_lstm_forward.1} parent=0 // pred_fallthru
    _
  // Predicated region
  $region42: #{sentiment_lstm_forward.1} parent=0 // pred_check
    _
  $region43: #{sentiment_lstm_forward.1} parent=0 // pred_check_branch
    %1772 = sbr.rel (0) target = $region45
  $region44: #{sentiment_lstm_forward.1} parent=0 // pred_region
    _
  $region45: #{sentiment_lstm_forward.1} parent=0 // pred_fallthru
    _
  // Predicated region
  $region46: #{sentiment_lstm_forward.1} parent=0 // pred_check
    _
  $region47: #{sentiment_lstm_forward.1} parent=0 // pred_check_branch
    %1774 = sbr.rel (0) target = $region49
  $region48: #{sentiment_lstm_forward.1} parent=0 // pred_region
    _
  $region49: #{sentiment_lstm_forward.1} parent=0 // pred_fallthru
    _
  // Predicated region
  $region50: #{sentiment_lstm_forward.1} parent=0 // pred_check
    _
  $region51: #{sentiment_lstm_forward.1} parent=0 // pred_check_branch
    %1776 = sbr.rel (0) target = $region53
  $region52: #{sentiment_lstm_forward.1} parent=0 // pred_region
    _
  $region53: #{sentiment_lstm_forward.1} parent=0 // pred_fallthru
    _
  // Predicated region
  $region54: #{sentiment_lstm_forward.1} parent=0 // pred_check
    _
  $region55: #{sentiment_lstm_forward.1} parent=0 // pred_check_branch
    %1778 = sbr.rel (0) target = $region57
  $region56: #{sentiment_lstm_forward.1} parent=0 // pred_region
    _
  $region57: #{sentiment_lstm_forward.1} parent=0 // pred_fallthru
    _
  // Predicated region
  $region58: #{sentiment_lstm_forward.1} parent=0 // pred_check
    _
  $region59: #{sentiment_lstm_forward.1} parent=0 // pred_check_branch
    %1780 = sbr.rel (0) target = $region61
  $region60: #{sentiment_lstm_forward.1} parent=0 // pred_region
    _
  $region61: #{sentiment_lstm_forward.1} parent=0 // pred_fallthru
    _

</llo_original>
